<compile_context>
chip_gen: v6e
topology: v6e:2x2x1
jax: 0.10.0
libtpu: 0.0.40
codegen_flags: <defaults>
</compile_context>

<pallas_src>
import math
import jax
import jax.numpy as jnp
from jax import lax
from jax.experimental import pallas as pl
from jax.experimental.pallas import tpu as pltpu

NEG_SLOPE = 0.01     # nn.LeakyReLU default
NUM_HEADS = 8        # nn.MultiheadAttention(num_heads=8)
LN_EPS = 1e-5        # nn.LayerNorm default


def _leaky(x):
    return jnp.where(x >= 0, x, NEG_SLOPE * x)


def _softmax(x, axis):
    m = jnp.max(x, axis=axis, keepdims=True)
    e = jnp.exp(x - m)
    s = jnp.sum(e, axis=axis, keepdims=True)
    return e * pl.reciprocal(s, approx=True)


def _mm(a, b):
    # a @ b with f32 accumulation
    return jnp.dot(a, b, preferred_element_type=jnp.float32)


def _mm_t0(a, b):
    # contract dim 0 of a with dim 0 of b: [K, M] x [K, N] -> [M, N]  (a.T @ b, no transpose op)
    return lax.dot_general(a, b, (((0,), (0,)), ((), ())),
                           preferred_element_type=jnp.float32)


def _mm_t1(a, b):
    # contract dim 1 of a with dim 1 of b: [M, K] x [N, K] -> [M, N]  (a @ b.T, no transpose op)
    return lax.dot_general(a, b, (((1,), (1,)), ((), ())),
                           preferred_element_type=jnp.float32)


# --------------------------------------------------------------------------- #
# Kernel 1: MPNN + attention -> [N, 3] (target_prob, context_prob, w_r_prob)   #
# --------------------------------------------------------------------------- #
def gnn_probs_kernel(
    node_ref, edge_ref, src_oh_ref, dst_oh_ref, pe_ref, hmask_ref,
    wsrc_ref, wedge_ref, bmsg_ref, wself_ref, bself_ref,
    wproj_ref, bproj_ref,                 # fused [D, 3D+2]: [k1 | v1 | k2 | target | context]
    q1w_ref, q1b_ref, o1w_ref, o1b_ref,
    gamma_ref, beta_ref, wmlp_ref, bmlp_ref,
    q2w_ref, q2b_ref,
    probs_ref,                            # out: [N, 3] f32
):
    N, D = node_ref.shape
    L = wsrc_ref.shape[0]
    dh = D // NUM_HEADS
    scale = 1.0 / math.sqrt(dh)
    bf16 = jnp.bfloat16

    src_oh = src_oh_ref[...]              # [E, N] bf16  (gather matrix)
    dst_oh = dst_oh_ref[...]              # [E, N] bf16  (scatter matrix, un-transposed)
    e_b = edge_ref[...]                   # [E, D] bf16
    hmask = hmask_ref[...]                # [D, H] bf16  head-membership mask

    h = node_ref[...].astype(jnp.float32)  # [N, D] f32 activations

    # ---- MPNN (layer_num layers, statically unrolled; L is tiny) ------------
    # TODO(synk): original MPNN class definition not provided; a standard
    # edge-conditioned message -> scatter-add -> self-update scheme is used with
    # the declared (in=D, out=D, edge_f_dim=D) shapes.
    for l in range(L):
        h_b = h.astype(bf16)
        hp = _mm(h_b, wsrc_ref[l]).astype(bf16)            # [N, D]  h @ W_src (reassociated)
        msg = _leaky(_mm(src_oh, hp)                       # gather of projected source feats
                     + _mm(e_b, wedge_ref[l])              # edge term
                     + bmsg_ref[l])                        # [E, D] f32
        agg = _mm_t0(dst_oh, msg.astype(bf16))             # scatter-add -> [N, D] f32
        h = _leaky(_mm(h_b, wself_ref[l]) + bself_ref[l] + agg)

    # ---- activation + positional encoding -----------------------------------
    # TODO(synk): dropout inside PositionalEncoding treated as eval-mode identity.
    hidden = _leaky(h) + pe_ref[...]                       # [N, D] f32
    hidden_b = hidden.astype(bf16)

    # ---- fused projections of hidden: one MXU pass, then lane-slice ---------
    # (copy-free slicing only when D % 128 == 0; at toy D the copies are tiny)
    proj = _mm(hidden_b, wproj_ref[...]) + bproj_ref[...]  # [N, 3D+2] f32
    k1 = proj[:, 0:D]                                      # rel_attn keys
    v1 = proj[:, D:2 * D]                                  # rel_attn values
    k2 = proj[:, 2 * D:3 * D]                              # rel_attn_out keys
    tc_scores = proj[:, 3 * D:3 * D + 2]                   # target / context scores

    # ---- target / context probabilities (softmax over nodes, dim=0) ---------
    # TODO(synk): PyTorch overwrites context_fn with Linear(2*D, 1), which would
    # fail on [N, D] inputs; the Linear(D, 1) variant is used here instead.
    tc_probs = _softmax(tc_scores, axis=0)                 # [N, 2]
    c_prob = tc_probs[:, 1:2]                              # [N, 1]

    # ---- context-weighted embedding ------------------------------------------
    w_c = _mm_t0(c_prob, hidden)                           # [1, D]

    # ---- rel_attn: MHA(query=w_c [1,D], key=value=hidden), heads vectorized ---
    q1 = _mm(w_c.astype(bf16), q1w_ref[...]) + q1b_ref[...]      # [1, D]
    s1 = _mm((k1 * q1).astype(bf16), hmask) * scale              # [N, H] per-head scores
    p1 = _softmax(s1, axis=0)                                    # softmax over keys, per head
    ctx = jnp.sum(_mm_t1(p1.astype(bf16), hmask) * v1,
                  axis=0, keepdims=True)                         # [1, D] head-wise weighted sum
    attn1 = _mm(ctx.astype(bf16), o1w_ref[...]) + o1b_ref[...]   # [1, D] out_proj

    # ---- LayerNorm -----------------------------------------------------------
    mu = jnp.mean(attn1, axis=-1, keepdims=True)
    var = jnp.mean((attn1 - mu) ** 2, axis=-1, keepdims=True)
    atten_f = (attn1 - mu) * lax.rsqrt(var + LN_EPS) * gamma_ref[...] + beta_ref[...]

    # ---- attn_mlp + rel_attn_out attention weights (averaged over heads) -----
    q_in2 = _mm(atten_f.astype(bf16), wmlp_ref[...]) + bmlp_ref[...]   # [1, D]
    q2 = _mm(q_in2.astype(bf16), q2w_ref[...]) + q2b_ref[...]          # [1, D]
    s2 = _mm((k2 * q2).astype(bf16), hmask) * scale                    # [N, H]
    p2 = _softmax(s2, axis=0)                                          # softmax over keys per head
    w_r_prob = jnp.mean(p2, axis=1, keepdims=True)                     # [N, 1]

    probs_ref[...] = jnp.concatenate([tc_probs, w_r_prob], axis=1)     # [N, 3]


# --------------------------------------------------------------------------- #
# Kernel 2: per-batch phrase contraction  out[b] = probs.T @ phrases[b]        #
# --------------------------------------------------------------------------- #
def phrase_contract_kernel(probs_ref, phr_ref, out_ref):
    probs = probs_ref[...].astype(jnp.bfloat16)    # [N, 3]
    phr = phr_ref[0]                               # [N, Ppad] bf16
    out_ref[0] = _mm_t0(probs, phr)                # [3, Ppad] f32 (lane-dense store)


# --------------------------------------------------------------------------- #
# Wrapper                                                                      #
# --------------------------------------------------------------------------- #
def positional_encoding(n, d):
    position = jnp.arange(n, dtype=jnp.float32)[:, None]
    div_term = jnp.exp(jnp.arange(0, d, 2, dtype=jnp.float32)
                       * (-math.log(10000.0) / d))
    pe = jnp.zeros((n, d), dtype=jnp.float32)
    pe = pe.at[:, 0::2].set(jnp.sin(position * div_term))
    pe = pe.at[:, 1::2].set(jnp.cos(position * div_term))
    return pe


def init_params(key, D, L, pos_vocab, dep_vocab):
    ks = iter(jax.random.split(key, 40))

    def rnd(shape, scale=0.1):
        return (scale * jax.random.normal(next(ks), shape)).astype(jnp.float32)

    p = {}
    p["pos_embd"] = rnd((pos_vocab, D), 1.0)
    p["dep_embd"] = rnd((dep_vocab, D), 1.0)
    p["wmsg_src"] = rnd((L, D, D))
    p["wmsg_edge"] = rnd((L, D, D))
    p["bmsg"] = rnd((L, 1, D))
    p["wself"] = rnd((L, D, D))
    p["bself"] = rnd((L, 1, D))
    p["wt"] = rnd((D, 1)); p["bt"] = rnd((1, 1))
    p["wc"] = rnd((D, 1)); p["bc"] = rnd((1, 1))
    p["q1w"] = rnd((D, D)); p["k1w"] = rnd((D, D)); p["v1w"] = rnd((D, D))
    p["q1b"] = rnd((1, D)); p["k1b"] = rnd((1, D)); p["v1b"] = rnd((1, D))
    p["o1w"] = rnd((D, D)); p["o1b"] = rnd((1, D))
    p["ln_gamma"] = jnp.ones((1, D), jnp.float32)
    p["ln_beta"] = jnp.zeros((1, D), jnp.float32)
    p["wmlp"] = rnd((D, D)); p["bmlp"] = rnd((1, D))
    p["q2w"] = rnd((D, D)); p["k2w"] = rnd((D, D))
    p["q2b"] = rnd((1, D)); p["k2b"] = rnd((1, D))
    return p


def _clamp_vmem(requested_bytes):
    """Clamp a VMEM request to the physical capacity of the current chip."""
    try:
        cap = int(pltpu.get_tpu_info().vmem_capacity_bytes)   # 128 MiB v5e/v6e, 64 MiB v7x
    except Exception:                                         # pragma: no cover
        cap = 64 * 2**20
    headroom = 16 * 2**20
    return int(max(16 * 2**20, min(int(requested_bytes), cap - headroom)))


def gnn_par_attn_pos_embd2_forward(params, node_pos, edge_index, edge_tag, phrases):
    D = params["pos_embd"].shape[1]
    L = params["wmsg_src"].shape[0]
    dh = D // NUM_HEADS

    bf = lambda x: x.astype(jnp.bfloat16)
    f32 = lambda x: x.astype(jnp.float32)

    node_feat = bf(params["pos_embd"][node_pos])                       # [N, D]
    edge_feat = bf(params["dep_embd"][edge_tag])                       # [E, D]
    N = node_feat.shape[0]
    E = edge_feat.shape[0]

    # TODO(synk): one-hot gather/scatter (O(E*N)) acceptable at these graph sizes;
    # replace with scalar-prefetch row gathers for large graphs.
    src_oh = jax.nn.one_hot(edge_index[0], N, dtype=jnp.bfloat16)      # [E, N]
    dst_oh = jax.nn.one_hot(edge_index[1], N, dtype=jnp.bfloat16)      # [E, N] (no transpose)
    pe = positional_encoding(N, D)                                     # [N, D] f32

    head_mask = (jnp.arange(D)[:, None] // dh
                 == jnp.arange(NUM_HEADS)[None, :]).astype(jnp.bfloat16)  # [D, H] bf16

    # fused hidden-state projection: [k1 | v1 | k2 | target | context]
    wproj = bf(jnp.concatenate([params["k1w"], params["v1w"], params["k2w"],
                                params["wt"], params["wc"]], axis=1))      # [D, 3D+2]
    bproj = f32(jnp.concatenate([params["k1b"], params["v1b"], params["k2b"],
                                 params["bt"], params["bc"]], axis=1))     # [1, 3D+2]

    args1 = [
        node_feat, edge_feat, src_oh, dst_oh, pe, head_mask,
        bf(params["wmsg_src"]), bf(params["wmsg_edge"]), f32(params["bmsg"]),
        bf(params["wself"]), f32(params["bself"]),
        wproj, bproj,
        bf(params["q1w"]), f32(params["q1b"]), bf(params["o1w"]), f32(params["o1b"]),
        f32(params["ln_gamma"]), f32(params["ln_beta"]),
        bf(params["wmlp"]), f32(params["bmlp"]),
        bf(params["q2w"]), f32(params["q2b"]),
    ]

    arg1_bytes = sum(int(a.size) * a.dtype.itemsize for a in args1)
    out1_bytes = N * 3 * 4
    # f32 intermediates: h/hp/agg/hidden, msg, fused proj, per-head scores/probs
    inter1_bytes = 4 * (8 * N * D + 3 * E * D + N * (3 * D + 2) + 6 * N * NUM_HEADS)
    vmem1 = _clamp_vmem(arg1_bytes + out1_bytes + inter1_bytes + (4 << 20))

    flops1 = int(2 * (L * (2 * N * D * D + 2 * E * N * D + E * D * D)
                      + N * D * (3 * D + 2) + 5 * D * D
                      + 4 * N * D * NUM_HEADS + 2 * N * D))
    cost1 = pl.CostEstimate(flops=flops1,
                            transcendentals=int(N * (2 + 2 * NUM_HEADS) + 8),
                            bytes_accessed=arg1_bytes + out1_bytes)

    vmem_spec = pl.BlockSpec(memory_space=pltpu.MemorySpace.VMEM)
    probs = pl.pallas_call(
        gnn_probs_kernel,
        out_shape=jax.ShapeDtypeStruct((N, 3), jnp.float32),
        in_specs=[vmem_spec] * len(args1),
        out_specs=vmem_spec,
        compiler_params=pltpu.CompilerParams(vmem_limit_bytes=vmem1),
        cost_estimate=cost1,
    )(*args1)

    # ---- phrase contraction: grid over the phrase batch ("parallel") --------
    B, Np, P = phrases.shape
    Pp = ((P + 127) // 128) * 128                                      # lane-dense output
    phr_b = jnp.pad(bf(phrases), ((0, 0), (0, 0), (0, Pp - P)))        # [B, N, Pp] bf16

    blk2_bytes = N * 3 * 4 + N * Pp * 2 + 3 * Pp * 4
    vmem2 = _clamp_vmem(2 * blk2_bytes + (2 << 20))
    cost2 = pl.CostEstimate(flops=int(2 * B * 3 * Np * Pp), transcendentals=0,
                            bytes_accessed=int(N * 3 * 4 + phr_b.size * 2 + B * 3 * Pp * 4))

    out = pl.pallas_call(
        phrase_contract_kernel,
        out_shape=jax.ShapeDtypeStruct((B, 3, Pp), jnp.float32),
        grid=(B,),
        in_specs=[pl.BlockSpec((N, 3), lambda b: (0, 0)),
                  pl.BlockSpec((1, Np, Pp), lambda b: (b, 0, 0))],
        out_specs=pl.BlockSpec((1, 3, Pp), lambda b: (b, 0, 0)),
        compiler_params=pltpu.CompilerParams(
            dimension_semantics=("parallel",),
            vmem_limit_bytes=vmem2),
        cost_estimate=cost2,
    )(probs, phr_b)

    out3 = out[:, :, :P]                                               # [B, 3, P]
    return out3[:, 0], out3[:, 1], out3[:, 2]                          # target-, context-, rel-weighted


if __name__ == "__main__":
    D, L = 32, 2          # embd_dim, layer_num
    N, E = 8, 10          # nodes, edges
    B, P = 2, 16          # phrase batch, phrase feature dim
    POS_VOCAB, DEP_VOCAB = 16, 20

    key = jax.random.PRNGKey(0)
    k_param, k_phr = jax.random.split(key)
    params = init_params(k_param, D, L, POS_VOCAB, DEP_VOCAB)

    node_pos = jnp.array([1, 3, 0, 2, 5, 7, 4, 6], dtype=jnp.int32)            # [N]
    edge_index = jnp.array([[0, 1, 2, 3, 4, 5, 6, 7, 0, 3],
                            [1, 2, 3, 4, 5, 6, 7, 0, 4, 7]], dtype=jnp.int32)  # [2, E]
    edge_tag = jnp.arange(E, dtype=jnp.int32) % DEP_VOCAB                      # [E]
    phrases = jax.random.normal(k_phr, (B, N, P), dtype=jnp.float32)           # [B, N, P]

    outs = gnn_par_attn_pos_embd2_forward(params, node_pos, edge_index, edge_tag, phrases)
    jax.block_until_ready(outs)
    assert all(o.shape == (B, P) for o in outs)
    print("KERNEL_OK")
</pallas_src>

<mosaic_0001>
module attributes {stable_mosaic.version = 11 : i64} {
  func.func @gnn_probs_kernel(%arg0: memref<8x32xbf16, #tpu.memory_space<vmem>>, %arg1: memref<10x32xbf16, #tpu.memory_space<vmem>>, %arg2: memref<10x8xbf16, #tpu.memory_space<vmem>>, %arg3: memref<10x8xbf16, #tpu.memory_space<vmem>>, %arg4: memref<8x32xf32, #tpu.memory_space<vmem>>, %arg5: memref<32x8xbf16, #tpu.memory_space<vmem>>, %arg6: memref<2x32x32xbf16, #tpu.memory_space<vmem>>, %arg7: memref<2x32x32xbf16, #tpu.memory_space<vmem>>, %arg8: memref<2x1x32xf32, #tpu.memory_space<vmem>>, %arg9: memref<2x32x32xbf16, #tpu.memory_space<vmem>>, %arg10: memref<2x1x32xf32, #tpu.memory_space<vmem>>, %arg11: memref<32x98xbf16, #tpu.memory_space<vmem>>, %arg12: memref<1x98xf32, #tpu.memory_space<vmem>>, %arg13: memref<32x32xbf16, #tpu.memory_space<vmem>>, %arg14: memref<1x32xf32, #tpu.memory_space<vmem>>, %arg15: memref<32x32xbf16, #tpu.memory_space<vmem>>, %arg16: memref<1x32xf32, #tpu.memory_space<vmem>>, %arg17: memref<1x32xf32, #tpu.memory_space<vmem>>, %arg18: memref<1x32xf32, #tpu.memory_space<vmem>>, %arg19: memref<32x32xbf16, #tpu.memory_space<vmem>>, %arg20: memref<1x32xf32, #tpu.memory_space<vmem>>, %arg21: memref<32x32xbf16, #tpu.memory_space<vmem>>, %arg22: memref<1x32xf32, #tpu.memory_space<vmem>>, %arg23: memref<8x3xf32, #tpu.memory_space<vmem>>) attributes {dimension_semantics = [], scalar_prefetch = 0 : i64, scratch_operands = 0 : i64, tpu.core_type = #tpu.core_type<tc>} {
    %c0 = arith.constant 0 : index
    %c0_0 = arith.constant 0 : index
    %0 = vector.load %arg2[%c0, %c0_0] : memref<10x8xbf16, #tpu.memory_space<vmem>>, vector<10x8xbf16>
    %c0_1 = arith.constant 0 : index
    %c0_2 = arith.constant 0 : index
    %1 = vector.load %arg3[%c0_1, %c0_2] : memref<10x8xbf16, #tpu.memory_space<vmem>>, vector<10x8xbf16>
    %c0_3 = arith.constant 0 : index
    %c0_4 = arith.constant 0 : index
    %2 = vector.load %arg1[%c0_3, %c0_4] : memref<10x32xbf16, #tpu.memory_space<vmem>>, vector<10x32xbf16>
    %c0_5 = arith.constant 0 : index
    %c0_6 = arith.constant 0 : index
    %3 = vector.load %arg5[%c0_5, %c0_6] : memref<32x8xbf16, #tpu.memory_space<vmem>>, vector<32x8xbf16>
    %c0_7 = arith.constant 0 : index
    %c0_8 = arith.constant 0 : index
    %4 = vector.load %arg0[%c0_7, %c0_8] : memref<8x32xbf16, #tpu.memory_space<vmem>>, vector<8x32xbf16>
    %5 = arith.extf %4 : vector<8x32xbf16> to vector<8x32xf32>
    %6 = arith.truncf %5 : vector<8x32xf32> to vector<8x32xbf16>
    %c0_9 = arith.constant 0 : index
    %c0_10 = arith.constant 0 : index
    %c0_11 = arith.constant 0 : index
    %7 = vector.load %arg6[%c0_9, %c0_10, %c0_11] : memref<2x32x32xbf16, #tpu.memory_space<vmem>>, vector<1x32x32xbf16>
    %8 = vector.shape_cast %7 : vector<1x32x32xbf16> to vector<32x32xbf16>
    %cst = arith.constant dense<0.000000e+00> : vector<8x32xf32>
    %9 = tpu.matmul %6, %8, %cst {dimension_numbers = #tpu.dot_dimension_numbers<[1], [0], [0], [1], [0, 0, 1, 1], [], []>} : vector<8x32xbf16>, vector<32x32xbf16>, vector<8x32xf32> -> vector<8x32xf32>
    %10 = arith.truncf %9 : vector<8x32xf32> to vector<8x32xbf16>
    %cst_12 = arith.constant dense<0.000000e+00> : vector<10x32xf32>
    %11 = tpu.matmul %0, %10, %cst_12 {dimension_numbers = #tpu.dot_dimension_numbers<[1], [0], [0], [1], [0, 0, 1, 1], [], []>} : vector<10x8xbf16>, vector<8x32xbf16>, vector<10x32xf32> -> vector<10x32xf32>
    %c0_13 = arith.constant 0 : index
    %c0_14 = arith.constant 0 : index
    %c0_15 = arith.constant 0 : index
    %12 = vector.load %arg7[%c0_13, %c0_14, %c0_15] : memref<2x32x32xbf16, #tpu.memory_space<vmem>>, vector<1x32x32xbf16>
    %13 = vector.shape_cast %12 : vector<1x32x32xbf16> to vector<32x32xbf16>
    %cst_16 = arith.constant dense<0.000000e+00> : vector<10x32xf32>
    %14 = tpu.matmul %2, %13, %cst_16 {dimension_numbers = #tpu.dot_dimension_numbers<[1], [0], [0], [1], [0, 0, 1, 1], [], []>} : vector<10x32xbf16>, vector<32x32xbf16>, vector<10x32xf32> -> vector<10x32xf32>
    %15 = arith.addf %11, %14 : vector<10x32xf32>
    %c0_17 = arith.constant 0 : index
    %c0_18 = arith.constant 0 : index
    %c0_19 = arith.constant 0 : index
    %16 = vector.load %arg8[%c0_17, %c0_18, %c0_19] : memref<2x1x32xf32, #tpu.memory_space<vmem>>, vector<1x1x32xf32>
    %17 = vector.shape_cast %16 : vector<1x1x32xf32> to vector<1x32xf32>
    %18 = vector.broadcast %17 : vector<1x32xf32> to vector<10x32xf32>
    %19 = arith.addf %15, %18 : vector<10x32xf32>
    %cst_20 = arith.constant 0.000000e+00 : f32
    %20 = vector.broadcast %cst_20 : f32 to vector<10x32xf32>
    %21 = arith.cmpf oge, %19, %20 : vector<10x32xf32>
    %cst_21 = arith.constant 0.00999999977 : f32
    %22 = vector.broadcast %cst_21 : f32 to vector<10x32xf32>
    %23 = arith.mulf %22, %19 : vector<10x32xf32>
    %24 = arith.select %21, %19, %23 : vector<10x32xi1>, vector<10x32xf32>
    %25 = arith.truncf %24 : vector<10x32xf32> to vector<10x32xbf16>
    %cst_22 = arith.constant dense<0.000000e+00> : vector<8x32xf32>
    %26 = tpu.matmul %1, %25, %cst_22 {dimension_numbers = #tpu.dot_dimension_numbers<[0], [0], [1], [1], [0, 1, 1, 1], [], []>} : vector<10x8xbf16>, vector<10x32xbf16>, vector<8x32xf32> -> vector<8x32xf32>
    %c0_23 = arith.constant 0 : index
    %c0_24 = arith.constant 0 : index
    %c0_25 = arith.constant 0 : index
    %27 = vector.load %arg9[%c0_23, %c0_24, %c0_25] : memref<2x32x32xbf16, #tpu.memory_space<vmem>>, vector<1x32x32xbf16>
    %28 = vector.shape_cast %27 : vector<1x32x32xbf16> to vector<32x32xbf16>
    %cst_26 = arith.constant dense<0.000000e+00> : vector<8x32xf32>
    %29 = tpu.matmul %6, %28, %cst_26 {dimension_numbers = #tpu.dot_dimension_numbers<[1], [0], [0], [1], [0, 0, 1, 1], [], []>} : vector<8x32xbf16>, vector<32x32xbf16>, vector<8x32xf32> -> vector<8x32xf32>
    %c0_27 = arith.constant 0 : index
    %c0_28 = arith.constant 0 : index
    %c0_29 = arith.constant 0 : index
    %30 = vector.load %arg10[%c0_27, %c0_28, %c0_29] : memref<2x1x32xf32, #tpu.memory_space<vmem>>, vector<1x1x32xf32>
    %31 = vector.shape_cast %30 : vector<1x1x32xf32> to vector<1x32xf32>
    %32 = vector.broadcast %31 : vector<1x32xf32> to vector<8x32xf32>
    %33 = arith.addf %29, %32 : vector<8x32xf32>
    %34 = arith.addf %33, %26 : vector<8x32xf32>
    %cst_30 = arith.constant 0.000000e+00 : f32
    %35 = vector.broadcast %cst_30 : f32 to vector<8x32xf32>
    %36 = arith.cmpf oge, %34, %35 : vector<8x32xf32>
    %cst_31 = arith.constant 0.00999999977 : f32
    %37 = vector.broadcast %cst_31 : f32 to vector<8x32xf32>
    %38 = arith.mulf %37, %34 : vector<8x32xf32>
    %39 = arith.select %36, %34, %38 : vector<8x32xi1>, vector<8x32xf32>
    %40 = arith.truncf %39 : vector<8x32xf32> to vector<8x32xbf16>
    %c1 = arith.constant 1 : index
    %c0_32 = arith.constant 0 : index
    %c0_33 = arith.constant 0 : index
    %41 = vector.load %arg6[%c1, %c0_32, %c0_33] : memref<2x32x32xbf16, #tpu.memory_space<vmem>>, vector<1x32x32xbf16>
    %42 = vector.shape_cast %41 : vector<1x32x32xbf16> to vector<32x32xbf16>
    %cst_34 = arith.constant dense<0.000000e+00> : vector<8x32xf32>
    %43 = tpu.matmul %40, %42, %cst_34 {dimension_numbers = #tpu.dot_dimension_numbers<[1], [0], [0], [1], [0, 0, 1, 1], [], []>} : vector<8x32xbf16>, vector<32x32xbf16>, vector<8x32xf32> -> vector<8x32xf32>
    %44 = arith.truncf %43 : vector<8x32xf32> to vector<8x32xbf16>
    %cst_35 = arith.constant dense<0.000000e+00> : vector<10x32xf32>
    %45 = tpu.matmul %0, %44, %cst_35 {dimension_numbers = #tpu.dot_dimension_numbers<[1], [0], [0], [1], [0, 0, 1, 1], [], []>} : vector<10x8xbf16>, vector<8x32xbf16>, vector<10x32xf32> -> vector<10x32xf32>
    %c1_36 = arith.constant 1 : index
    %c0_37 = arith.constant 0 : index
    %c0_38 = arith.constant 0 : index
    %46 = vector.load %arg7[%c1_36, %c0_37, %c0_38] : memref<2x32x32xbf16, #tpu.memory_space<vmem>>, vector<1x32x32xbf16>
    %47 = vector.shape_cast %46 : vector<1x32x32xbf16> to vector<32x32xbf16>
    %cst_39 = arith.constant dense<0.000000e+00> : vector<10x32xf32>
    %48 = tpu.matmul %2, %47, %cst_39 {dimension_numbers = #tpu.dot_dimension_numbers<[1], [0], [0], [1], [0, 0, 1, 1], [], []>} : vector<10x32xbf16>, vector<32x32xbf16>, vector<10x32xf32> -> vector<10x32xf32>
    %49 = arith.addf %45, %48 : vector<10x32xf32>
    %c1_40 = arith.constant 1 : index
    %c0_41 = arith.constant 0 : index
    %c0_42 = arith.constant 0 : index
    %50 = vector.load %arg8[%c1_40, %c0_41, %c0_42] : memref<2x1x32xf32, #tpu.memory_space<vmem>>, vector<1x1x32xf32>
    %51 = vector.shape_cast %50 : vector<1x1x32xf32> to vector<1x32xf32>
    %52 = vector.broadcast %51 : vector<1x32xf32> to vector<10x32xf32>
    %53 = arith.addf %49, %52 : vector<10x32xf32>
    %cst_43 = arith.constant 0.000000e+00 : f32
    %54 = vector.broadcast %cst_43 : f32 to vector<10x32xf32>
    %55 = arith.cmpf oge, %53, %54 : vector<10x32xf32>
    %cst_44 = arith.constant 0.00999999977 : f32
    %56 = vector.broadcast %cst_44 : f32 to vector<10x32xf32>
    %57 = arith.mulf %56, %53 : vector<10x32xf32>
    %58 = arith.select %55, %53, %57 : vector<10x32xi1>, vector<10x32xf32>
    %59 = arith.truncf %58 : vector<10x32xf32> to vector<10x32xbf16>
    %cst_45 = arith.constant dense<0.000000e+00> : vector<8x32xf32>
    %60 = tpu.matmul %1, %59, %cst_45 {dimension_numbers = #tpu.dot_dimension_numbers<[0], [0], [1], [1], [0, 1, 1, 1], [], []>} : vector<10x8xbf16>, vector<10x32xbf16>, vector<8x32xf32> -> vector<8x32xf32>
    %c1_46 = arith.constant 1 : index
    %c0_47 = arith.constant 0 : index
    %c0_48 = arith.constant 0 : index
    %61 = vector.load %arg9[%c1_46, %c0_47, %c0_48] : memref<2x32x32xbf16, #tpu.memory_space<vmem>>, vector<1x32x32xbf16>
    %62 = vector.shape_cast %61 : vector<1x32x32xbf16> to vector<32x32xbf16>
    %cst_49 = arith.constant dense<0.000000e+00> : vector<8x32xf32>
    %63 = tpu.matmul %40, %62, %cst_49 {dimension_numbers = #tpu.dot_dimension_numbers<[1], [0], [0], [1], [0, 0, 1, 1], [], []>} : vector<8x32xbf16>, vector<32x32xbf16>, vector<8x32xf32> -> vector<8x32xf32>
    %c1_50 = arith.constant 1 : index
    %c0_51 = arith.constant 0 : index
    %c0_52 = arith.constant 0 : index
    %64 = vector.load %arg10[%c1_50, %c0_51, %c0_52] : memref<2x1x32xf32, #tpu.memory_space<vmem>>, vector<1x1x32xf32>
    %65 = vector.shape_cast %64 : vector<1x1x32xf32> to vector<1x32xf32>
    %66 = vector.broadcast %65 : vector<1x32xf32> to vector<8x32xf32>
    %67 = arith.addf %63, %66 : vector<8x32xf32>
    %68 = arith.addf %67, %60 : vector<8x32xf32>
    %cst_53 = arith.constant 0.000000e+00 : f32
    %69 = vector.broadcast %cst_53 : f32 to vector<8x32xf32>
    %70 = arith.cmpf oge, %68, %69 : vector<8x32xf32>
    %cst_54 = arith.constant 0.00999999977 : f32
    %71 = vector.broadcast %cst_54 : f32 to vector<8x32xf32>
    %72 = arith.mulf %71, %68 : vector<8x32xf32>
    %73 = arith.select %70, %68, %72 : vector<8x32xi1>, vector<8x32xf32>
    %cst_55 = arith.constant 0.000000e+00 : f32
    %74 = vector.broadcast %cst_55 : f32 to vector<8x32xf32>
    %75 = arith.cmpf oge, %73, %74 : vector<8x32xf32>
    %cst_56 = arith.constant 0.00999999977 : f32
    %76 = vector.broadcast %cst_56 : f32 to vector<8x32xf32>
    %77 = arith.mulf %76, %73 : vector<8x32xf32>
    %78 = arith.select %75, %73, %77 : vector<8x32xi1>, vector<8x32xf32>
    %c0_57 = arith.constant 0 : index
    %c0_58 = arith.constant 0 : index
    %79 = vector.load %arg4[%c0_57, %c0_58] : memref<8x32xf32, #tpu.memory_space<vmem>>, vector<8x32xf32>
    %80 = arith.addf %78, %79 : vector<8x32xf32>
    %81 = arith.truncf %80 : vector<8x32xf32> to vector<8x32xbf16>
    %c0_59 = arith.constant 0 : index
    %c0_60 = arith.constant 0 : index
    %82 = vector.load %arg11[%c0_59, %c0_60] : memref<32x98xbf16, #tpu.memory_space<vmem>>, vector<32x98xbf16>
    %cst_61 = arith.constant dense<0.000000e+00> : vector<8x98xf32>
    %83 = tpu.matmul %81, %82, %cst_61 {dimension_numbers = #tpu.dot_dimension_numbers<[1], [0], [0], [1], [0, 0, 1, 1], [], []>} : vector<8x32xbf16>, vector<32x98xbf16>, vector<8x98xf32> -> vector<8x98xf32>
    %c0_62 = arith.constant 0 : index
    %c0_63 = arith.constant 0 : index
    %84 = vector.load %arg12[%c0_62, %c0_63] : memref<1x98xf32, #tpu.memory_space<vmem>>, vector<1x98xf32>
    %85 = vector.broadcast %84 : vector<1x98xf32> to vector<8x98xf32>
    %86 = arith.addf %83, %85 : vector<8x98xf32>
    %87 = vector.extract_strided_slice %86 {offsets = [0, 0], sizes = [8, 32], strides = [1, 1]} : vector<8x98xf32> to vector<8x32xf32>
    %88 = vector.extract_strided_slice %86 {offsets = [0, 32], sizes = [8, 32], strides = [1, 1]} : vector<8x98xf32> to vector<8x32xf32>
    %89 = vector.extract_strided_slice %86 {offsets = [0, 64], sizes = [8, 32], strides = [1, 1]} : vector<8x98xf32> to vector<8x32xf32>
    %90 = vector.extract_strided_slice %86 {offsets = [0, 96], sizes = [8, 2], strides = [1, 1]} : vector<8x98xf32> to vector<8x2xf32>
    %cst_64 = arith.constant dense<0xFF800000> : vector<2xf32>
    %91 = vector.multi_reduction <maximumf>, %90, %cst_64 [0] : vector<8x2xf32> to vector<2xf32>
    %92 = vector.shape_cast %91 : vector<2xf32> to vector<1x2xf32>
    %93 = vector.broadcast %92 : vector<1x2xf32> to vector<8x2xf32>
    %94 = arith.subf %90, %93 : vector<8x2xf32>
    %95 = math.exp %94 : vector<8x2xf32>
    %cst_65 = arith.constant dense<0.000000e+00> : vector<2xf32>
    %96 = vector.multi_reduction <add>, %95, %cst_65 [0] : vector<8x2xf32> to vector<2xf32>
    %97 = vector.shape_cast %96 : vector<2xf32> to vector<1x2xf32>
    %98 = tpu.reciprocal %97 {approx = true} : vector<1x2xf32> -> vector<1x2xf32>
    %99 = vector.broadcast %98 : vector<1x2xf32> to vector<8x2xf32>
    %100 = arith.mulf %95, %99 : vector<8x2xf32>
    %101 = vector.extract_strided_slice %100 {offsets = [0, 1], sizes = [8, 1], strides = [1, 1]} : vector<8x2xf32> to vector<8x1xf32>
    %cst_66 = arith.constant dense<0.000000e+00> : vector<1x32xf32>
    %102 = tpu.matmul %101, %80, %cst_66 {dimension_numbers = #tpu.dot_dimension_numbers<[0], [0], [1], [1], [0, 1, 1, 1], [], []>} : vector<8x1xf32>, vector<8x32xf32>, vector<1x32xf32> -> vector<1x32xf32>
    %103 = arith.truncf %102 : vector<1x32xf32> to vector<1x32xbf16>
    %c0_67 = arith.constant 0 : index
    %c0_68 = arith.constant 0 : index
    %104 = vector.load %arg13[%c0_67, %c0_68] : memref<32x32xbf16, #tpu.memory_space<vmem>>, vector<32x32xbf16>
    %cst_69 = arith.constant dense<0.000000e+00> : vector<1x32xf32>
    %105 = tpu.matmul %103, %104, %cst_69 {dimension_numbers = #tpu.dot_dimension_numbers<[1], [0], [0], [1], [0, 0, 1, 1], [], []>} : vector<1x32xbf16>, vector<32x32xbf16>, vector<1x32xf32> -> vector<1x32xf32>
    %c0_70 = arith.constant 0 : index
    %c0_71 = arith.constant 0 : index
    %106 = vector.load %arg14[%c0_70, %c0_71] : memref<1x32xf32, #tpu.memory_space<vmem>>, vector<1x32xf32>
    %107 = arith.addf %105, %106 : vector<1x32xf32>
    %108 = vector.broadcast %107 : vector<1x32xf32> to vector<8x32xf32>
    %109 = arith.mulf %87, %108 : vector<8x32xf32>
    %110 = arith.truncf %109 : vector<8x32xf32> to vector<8x32xbf16>
    %cst_72 = arith.constant dense<0.000000e+00> : vector<8x8xf32>
    %111 = tpu.matmul %110, %3, %cst_72 {dimension_numbers = #tpu.dot_dimension_numbers<[1], [0], [0], [1], [0, 0, 1, 1], [], []>} : vector<8x32xbf16>, vector<32x8xbf16>, vector<8x8xf32> -> vector<8x8xf32>
    %cst_73 = arith.constant 5.000000e-01 : f32
    %112 = vector.broadcast %cst_73 : f32 to vector<8x8xf32>
    %113 = arith.mulf %111, %112 : vector<8x8xf32>
    %cst_74 = arith.constant dense<0xFF800000> : vector<8xf32>
    %114 = vector.multi_reduction <maximumf>, %113, %cst_74 [0] : vector<8x8xf32> to vector<8xf32>
    %115 = vector.shape_cast %114 : vector<8xf32> to vector<1x8xf32>
    %116 = vector.broadcast %115 : vector<1x8xf32> to vector<8x8xf32>
    %117 = arith.subf %113, %116 : vector<8x8xf32>
    %118 = math.exp %117 : vector<8x8xf32>
    %cst_75 = arith.constant dense<0.000000e+00> : vector<8xf32>
    %119 = vector.multi_reduction <add>, %118, %cst_75 [0] : vector<8x8xf32> to vector<8xf32>
    %120 = vector.shape_cast %119 : vector<8xf32> to vector<1x8xf32>
    %121 = tpu.reciprocal %120 {approx = true} : vector<1x8xf32> -> vector<1x8xf32>
    %122 = vector.broadcast %121 : vector<1x8xf32> to vector<8x8xf32>
    %123 = arith.mulf %118, %122 : vector<8x8xf32>
    %124 = arith.truncf %123 : vector<8x8xf32> to vector<8x8xbf16>
    %cst_76 = arith.constant dense<0.000000e+00> : vector<8x32xf32>
    %125 = tpu.matmul %124, %3, %cst_76 {dimension_numbers = #tpu.dot_dimension_numbers<[1], [1], [0], [0], [0, 0, 1, 0], [], []>} : vector<8x8xbf16>, vector<32x8xbf16>, vector<8x32xf32> -> vector<8x32xf32>
    %126 = arith.mulf %125, %88 : vector<8x32xf32>
    %cst_77 = arith.constant dense<0.000000e+00> : vector<32xf32>
    %127 = vector.multi_reduction <add>, %126, %cst_77 [0] : vector<8x32xf32> to vector<32xf32>
    %128 = vector.shape_cast %127 : vector<32xf32> to vector<1x32xf32>
    %129 = arith.truncf %128 : vector<1x32xf32> to vector<1x32xbf16>
    %c0_78 = arith.constant 0 : index
    %c0_79 = arith.constant 0 : index
    %130 = vector.load %arg15[%c0_78, %c0_79] : memref<32x32xbf16, #tpu.memory_space<vmem>>, vector<32x32xbf16>
    %cst_80 = arith.constant dense<0.000000e+00> : vector<1x32xf32>
    %131 = tpu.matmul %129, %130, %cst_80 {dimension_numbers = #tpu.dot_dimension_numbers<[1], [0], [0], [1], [0, 0, 1, 1], [], []>} : vector<1x32xbf16>, vector<32x32xbf16>, vector<1x32xf32> -> vector<1x32xf32>
    %c0_81 = arith.constant 0 : index
    %c0_82 = arith.constant 0 : index
    %132 = vector.load %arg16[%c0_81, %c0_82] : memref<1x32xf32, #tpu.memory_space<vmem>>, vector<1x32xf32>
    %133 = arith.addf %131, %132 : vector<1x32xf32>
    %cst_83 = arith.constant dense<0.000000e+00> : vector<1xf32>
    %134 = vector.multi_reduction <add>, %133, %cst_83 [1] : vector<1x32xf32> to vector<1xf32>
    %135 = vector.shape_cast %134 : vector<1xf32> to vector<1x1xf32>
    %cst_84 = arith.constant 3.200000e+01 : f32
    %136 = vector.broadcast %cst_84 : f32 to vector<1x1xf32>
    %137 = arith.divf %135, %136 : vector<1x1xf32>
    %138 = vector.broadcast %137 : vector<1x1xf32> to vector<1x32xf32>
    %139 = arith.subf %133, %138 : vector<1x32xf32>
    %140 = arith.mulf %139, %139 : vector<1x32xf32>
    %cst_85 = arith.constant dense<0.000000e+00> : vector<1xf32>
    %141 = vector.multi_reduction <add>, %140, %cst_85 [1] : vector<1x32xf32> to vector<1xf32>
    %142 = vector.shape_cast %141 : vector<1xf32> to vector<1x1xf32>
    %cst_86 = arith.constant 3.200000e+01 : f32
    %143 = vector.broadcast %cst_86 : f32 to vector<1x1xf32>
    %144 = arith.divf %142, %143 : vector<1x1xf32>
    %145 = vector.broadcast %137 : vector<1x1xf32> to vector<1x32xf32>
    %146 = arith.subf %133, %145 : vector<1x32xf32>
    %cst_87 = arith.constant 9.99999974E-6 : f32
    %147 = vector.broadcast %cst_87 : f32 to vector<1x1xf32>
    %148 = arith.addf %144, %147 : vector<1x1xf32>
    %149 = math.rsqrt %148 : vector<1x1xf32>
    %150 = vector.broadcast %149 : vector<1x1xf32> to vector<1x32xf32>
    %151 = arith.mulf %146, %150 : vector<1x32xf32>
    %c0_88 = arith.constant 0 : index
    %c0_89 = arith.constant 0 : index
    %152 = vector.load %arg17[%c0_88, %c0_89] : memref<1x32xf32, #tpu.memory_space<vmem>>, vector<1x32xf32>
    %153 = arith.mulf %151, %152 : vector<1x32xf32>
    %c0_90 = arith.constant 0 : index
    %c0_91 = arith.constant 0 : index
    %154 = vector.load %arg18[%c0_90, %c0_91] : memref<1x32xf32, #tpu.memory_space<vmem>>, vector<1x32xf32>
    %155 = arith.addf %153, %154 : vector<1x32xf32>
    %156 = arith.truncf %155 : vector<1x32xf32> to vector<1x32xbf16>
    %c0_92 = arith.constant 0 : index
    %c0_93 = arith.constant 0 : index
    %157 = vector.load %arg19[%c0_92, %c0_93] : memref<32x32xbf16, #tpu.memory_space<vmem>>, vector<32x32xbf16>
    %cst_94 = arith.constant dense<0.000000e+00> : vector<1x32xf32>
    %158 = tpu.matmul %156, %157, %cst_94 {dimension_numbers = #tpu.dot_dimension_numbers<[1], [0], [0], [1], [0, 0, 1, 1], [], []>} : vector<1x32xbf16>, vector<32x32xbf16>, vector<1x32xf32> -> vector<1x32xf32>
    %c0_95 = arith.constant 0 : index
    %c0_96 = arith.constant 0 : index
    %159 = vector.load %arg20[%c0_95, %c0_96] : memref<1x32xf32, #tpu.memory_space<vmem>>, vector<1x32xf32>
    %160 = arith.addf %158, %159 : vector<1x32xf32>
    %161 = arith.truncf %160 : vector<1x32xf32> to vector<1x32xbf16>
    %c0_97 = arith.constant 0 : index
    %c0_98 = arith.constant 0 : index
    %162 = vector.load %arg21[%c0_97, %c0_98] : memref<32x32xbf16, #tpu.memory_space<vmem>>, vector<32x32xbf16>
    %cst_99 = arith.constant dense<0.000000e+00> : vector<1x32xf32>
    %163 = tpu.matmul %161, %162, %cst_99 {dimension_numbers = #tpu.dot_dimension_numbers<[1], [0], [0], [1], [0, 0, 1, 1], [], []>} : vector<1x32xbf16>, vector<32x32xbf16>, vector<1x32xf32> -> vector<1x32xf32>
    %c0_100 = arith.constant 0 : index
    %c0_101 = arith.constant 0 : index
    %164 = vector.load %arg22[%c0_100, %c0_101] : memref<1x32xf32, #tpu.memory_space<vmem>>, vector<1x32xf32>
    %165 = arith.addf %163, %164 : vector<1x32xf32>
    %166 = vector.broadcast %165 : vector<1x32xf32> to vector<8x32xf32>
    %167 = arith.mulf %89, %166 : vector<8x32xf32>
    %168 = arith.truncf %167 : vector<8x32xf32> to vector<8x32xbf16>
    %cst_102 = arith.constant dense<0.000000e+00> : vector<8x8xf32>
    %169 = tpu.matmul %168, %3, %cst_102 {dimension_numbers = #tpu.dot_dimension_numbers<[1], [0], [0], [1], [0, 0, 1, 1], [], []>} : vector<8x32xbf16>, vector<32x8xbf16>, vector<8x8xf32> -> vector<8x8xf32>
    %cst_103 = arith.constant 5.000000e-01 : f32
    %170 = vector.broadcast %cst_103 : f32 to vector<8x8xf32>
    %171 = arith.mulf %169, %170 : vector<8x8xf32>
    %cst_104 = arith.constant dense<0xFF800000> : vector<8xf32>
    %172 = vector.multi_reduction <maximumf>, %171, %cst_104 [0] : vector<8x8xf32> to vector<8xf32>
    %173 = vector.shape_cast %172 : vector<8xf32> to vector<1x8xf32>
    %174 = vector.broadcast %173 : vector<1x8xf32> to vector<8x8xf32>
    %175 = arith.subf %171, %174 : vector<8x8xf32>
    %176 = math.exp %175 : vector<8x8xf32>
    %cst_105 = arith.constant dense<0.000000e+00> : vector<8xf32>
    %177 = vector.multi_reduction <add>, %176, %cst_105 [0] : vector<8x8xf32> to vector<8xf32>
    %178 = vector.shape_cast %177 : vector<8xf32> to vector<1x8xf32>
    %179 = tpu.reciprocal %178 {approx = true} : vector<1x8xf32> -> vector<1x8xf32>
    %180 = vector.broadcast %179 : vector<1x8xf32> to vector<8x8xf32>
    %181 = arith.mulf %176, %180 : vector<8x8xf32>
    %cst_106 = arith.constant dense<0.000000e+00> : vector<8xf32>
    %182 = vector.multi_reduction <add>, %181, %cst_106 [1] : vector<8x8xf32> to vector<8xf32>
    %183 = vector.shape_cast %182 : vector<8xf32> to vector<8x1xf32>
    %cst_107 = arith.constant 8.000000e+00 : f32
    %184 = vector.broadcast %cst_107 : f32 to vector<8x1xf32>
    %185 = arith.divf %183, %184 : vector<8x1xf32>
    %186 = tpu.concatenate %100, %185 in 1 : vector<8x2xf32>, vector<8x1xf32> -> vector<8x3xf32>
    %c0_108 = arith.constant 0 : index
    %c0_109 = arith.constant 0 : index
    %187 = vector.load %arg23[%c0_108, %c0_109] : memref<8x3xf32, #tpu.memory_space<vmem>>, vector<8x3xf32>
    tpu.vector_store %arg23[%c0_108, %c0_109], %186 {strides = array<i32>} : memref<8x3xf32, #tpu.memory_space<vmem>>, vector<8x3xf32>,
    return
  }
}

</mosaic_0001>

<llo_original>
// kernel: tpu_custom_call.1
$region0: #{tpu_custom_call.1}
  #allocation0 [shape = 'u32[]', space=smem, size = 0x4, offset = 0x4, fixed_abs, tag = 'smem constant byte address 0x4 - core index']
  #allocation1 [shape = 'u32[144,128]{1,0:T(1,128)}', space=vmem, size = 0x12000, scoped, tag = 'internal scratch']
  %s0 = inlined_call_operand.hbm [shape: bf16[8,32], index: 0, kind: input, shape index: {}]
  %s1 = inlined_call_operand.hbm [shape: bf16[10,32], index: 1, kind: input, shape index: {}]
  %s2 = inlined_call_operand.vmem [shape: bf16[10,8], index: 2, kind: input, shape index: {}]
  %s3 = inlined_call_operand.vmem [shape: bf16[10,8], index: 3, kind: input, shape index: {}]
  %s4 = inlined_call_operand.hbm [shape: f32[8,32], index: 4, kind: input, shape index: {}]
  %s5 = inlined_call_operand.vmem [shape: bf16[32,8], index: 5, kind: input, shape index: {}]
  %s6 = inlined_call_operand.vmem [shape: bf16[2,32,32], index: 6, kind: input, shape index: {}]
  %s7 = inlined_call_operand.hbm [shape: bf16[2,32,32], index: 7, kind: input, shape index: {}]
  %s8 = inlined_call_operand.hbm [shape: f32[2,1,32], index: 8, kind: input, shape index: {}]
  %s9 = inlined_call_operand.hbm [shape: bf16[2,32,32], index: 9, kind: input, shape index: {}]
  %s10 = inlined_call_operand.hbm [shape: f32[2,1,32], index: 10, kind: input, shape index: {}]
  %s11 = inlined_call_operand.vmem [shape: bf16[32,98], index: 11, kind: input, shape index: {}]
  %s12 = inlined_call_operand.hbm [shape: f32[1,98], index: 12, kind: input, shape index: {}]
  %s13 = inlined_call_operand.vmem [shape: bf16[32,32], index: 13, kind: input, shape index: {}]
  %s14 = inlined_call_operand.hbm [shape: f32[1,32], index: 14, kind: input, shape index: {}]
  %s15 = inlined_call_operand.hbm [shape: bf16[32,32], index: 15, kind: input, shape index: {}]
  %s16 = inlined_call_operand.hbm [shape: f32[1,32], index: 16, kind: input, shape index: {}]
  %s17 = inlined_call_operand.hbm [shape: f32[1,32], index: 17, kind: input, shape index: {}]
  %s18 = inlined_call_operand.hbm [shape: f32[1,32], index: 18, kind: input, shape index: {}]
  %s19 = inlined_call_operand.hbm [shape: bf16[32,32], index: 19, kind: input, shape index: {}]
  %s20 = inlined_call_operand.hbm [shape: f32[1,32], index: 20, kind: input, shape index: {}]
  %s21 = inlined_call_operand.vmem [shape: bf16[32,32], index: 21, kind: input, shape index: {}]
  %s22 = inlined_call_operand.vmem [shape: f32[1,32], index: 22, kind: input, shape index: {}]
  %s23 = inlined_call_operand.vmem [shape: f32[8,3], index: 23, kind: output, shape index: {}]
  %s24 = sld [smem:[#allocation0]]
  $region162: #{tpu_custom_call.1} parent=0
    _
  %s26 = ssub.s32 1, %s24
  %s27 = scalar_select 0, %s26, %s24
  $region1: #{tpu_custom_call.1} parent=0
    #allocation2 [shape = 'u8[2048]{0}', space=vmem, size = 0x800, scoped, tag = 'input window, operand 0, single buffered']
    #allocation3 [shape = 's32[1]{0}', space=sflag, size = 0x4, scoped, tag = 'scoped memory for tpu_custom_call.1']
    #allocation4 [shape = 'u8[4096]{0}', space=vmem, size = 0x1000, scoped, tag = 'input window, operand 1, single buffered']
    #allocation5 [shape = 's32[1]{0}', space=sflag, size = 0x4, scoped, tag = 'scoped memory for tpu_custom_call.1']
    #allocation6 [shape = 'u8[4096]{0}', space=vmem, size = 0x1000, scoped, tag = 'input window, operand 4, single buffered']
    #allocation7 [shape = 'u8[16384]{0}', space=vmem, size = 0x4000, scoped, tag = 'input window, operand 7, single buffered']
    #allocation8 [shape = 's32[1]{0}', space=sflag, size = 0x4, scoped, tag = 'scoped memory for tpu_custom_call.1']
    #allocation9 [shape = 'u8[1024]{0}', space=vmem, size = 0x400, scoped, tag = 'input window, operand 8, single buffered']
    #allocation10 [shape = 'u8[16384]{0}', space=vmem, size = 0x4000, scoped, tag = 'input window, operand 9, single buffered']
    #allocation11 [shape = 's32[1]{0}', space=sflag, size = 0x4, scoped, tag = 'scoped memory for tpu_custom_call.1']
    #allocation12 [shape = 'u8[1024]{0}', space=vmem, size = 0x400, scoped, tag = 'input window, operand 10, single buffered']
    #allocation13 [shape = 'u8[512]{0}', space=vmem, size = 0x400, scoped, tag = 'input window, operand 12, single buffered']
    #allocation14 [shape = 's32[1]{0}', space=sflag, size = 0x4, scoped, tag = 'scoped memory for tpu_custom_call.1']
    #allocation15 [shape = 'u8[512]{0}', space=vmem, size = 0x400, scoped, tag = 'input window, operand 14, single buffered']
    #allocation16 [shape = 'u8[8192]{0}', space=vmem, size = 0x2000, scoped, tag = 'input window, operand 15, single buffered']
    #allocation17 [shape = 's32[1]{0}', space=sflag, size = 0x4, scoped, tag = 'scoped memory for tpu_custom_call.1']
    #allocation18 [shape = 'u8[512]{0}', space=vmem, size = 0x400, scoped, tag = 'input window, operand 16, single buffered']
    #allocation19 [shape = 'u8[512]{0}', space=vmem, size = 0x400, scoped, tag = 'input window, operand 17, single buffered']
    #allocation20 [shape = 's32[1]{0}', space=sflag, size = 0x4, scoped, tag = 'scoped memory for tpu_custom_call.1']
    #allocation21 [shape = 'u8[512]{0}', space=vmem, size = 0x400, scoped, tag = 'input window, operand 18, single buffered']
    #allocation22 [shape = 'u8[8192]{0}', space=vmem, size = 0x2000, scoped, tag = 'input window, operand 19, single buffered']
    #allocation23 [shape = 's32[1]{0}', space=sflag, size = 0x4, scoped, tag = 'scoped memory for tpu_custom_call.1']
    #allocation24 [shape = 'u8[512]{0}', space=vmem, size = 0x400, scoped, tag = 'input window, operand 20, single buffered']
    %28 = vsyncpa [#allocation3], 0
    %29 = vsyncpa [#allocation5], 0
    %30 = vsyncpa [#allocation8], 0
    %31 = vsyncpa [#allocation11], 0
    %32 = vsyncpa [#allocation14], 0
    %33 = vsyncpa [#allocation17], 0
    %34 = vsyncpa [#allocation20], 0
    %35 = vsyncpa [#allocation23], 0
    // Predicated region
    $region2: #{tpu_custom_call.1} parent=1 // pred_check
      _
    $region3: #{tpu_custom_call.1} parent=1 // pred_check_branch
      %37 = sbr.rel (0) target = $region5
    $region4: #{tpu_custom_call.1} parent=1 // pred_region
      %s39 = ssub.s32 64, 64
      %40 = vsyncadd [#allocation3], %s39
      %s42 = sshll.u32 [#allocation2], 4
      %s43 = int_to_ptr.vmem [resolvable:$true] %s42
      %45 = dma.hbm_to_vmem [thread:$0]  %s0, 64, %s43, [#allocation3]
    $region5: #{tpu_custom_call.1} parent=1 // pred_fallthru
      _
    // Predicated region
    $region6: #{tpu_custom_call.1} parent=1 // pred_check
      _
    $region7: #{tpu_custom_call.1} parent=1 // pred_check_branch
      %47 = sbr.rel (0) target = $region9
    $region8: #{tpu_custom_call.1} parent=1 // pred_region
      %s49 = ssub.s32 128, 128
      %50 = vsyncadd [#allocation5], %s49
      %s51 = sshll.u32 [#allocation4], 4
      %s52 = int_to_ptr.vmem [resolvable:$true] %s51
      %57 = dma.hbm_to_vmem [thread:$0]  %s1, 128, %s52, [#allocation5], 64, 64, 4
    $region9: #{tpu_custom_call.1} parent=1 // pred_fallthru
      _
    // Predicated region
    $region10: #{tpu_custom_call.1} parent=1 // pred_check
      _
    $region11: #{tpu_custom_call.1} parent=1 // pred_check_branch
      %59 = sbr.rel (0) target = $region13
    $region12: #{tpu_custom_call.1} parent=1 // pred_region
      _
    $region13: #{tpu_custom_call.1} parent=1 // pred_fallthru
      _
    // Predicated region
    $region14: #{tpu_custom_call.1} parent=1 // pred_check
      _
    $region15: #{tpu_custom_call.1} parent=1 // pred_check_branch
      %61 = sbr.rel (0) target = $region17
    $region16: #{tpu_custom_call.1} parent=1 // pred_region
      _
    $region17: #{tpu_custom_call.1} parent=1 // pred_fallthru
      _
    // Predicated region
    $region18: #{tpu_custom_call.1} parent=1 // pred_check
      _
    $region19: #{tpu_custom_call.1} parent=1 // pred_check_branch
      %63 = sbr.rel (0) target = $region21
    $region20: #{tpu_custom_call.1} parent=1 // pred_region
      %s65 = ssub.s32 128, 128
      %66 = vsyncadd [#allocation5], %s65
      %s68 = sshll.u32 [#allocation6], 4
      %s69 = int_to_ptr.vmem [resolvable:$true] %s68
      %71 = dma.hbm_to_vmem [thread:$0]  %s4, 128, %s69, [#allocation5]
    $region21: #{tpu_custom_call.1} parent=1 // pred_fallthru
      _
    // Predicated region
    $region22: #{tpu_custom_call.1} parent=1 // pred_check
      _
    $region23: #{tpu_custom_call.1} parent=1 // pred_check_branch
      %73 = sbr.rel (0) target = $region25
    $region24: #{tpu_custom_call.1} parent=1 // pred_region
      _
    $region25: #{tpu_custom_call.1} parent=1 // pred_fallthru
      _
    // Predicated region
    $region26: #{tpu_custom_call.1} parent=1 // pred_check
      _
    $region27: #{tpu_custom_call.1} parent=1 // pred_check_branch
      %75 = sbr.rel (0) target = $region29
    $region28: #{tpu_custom_call.1} parent=1 // pred_region
      _
    $region29: #{tpu_custom_call.1} parent=1 // pred_fallthru
      _
    // Predicated region
    $region30: #{tpu_custom_call.1} parent=1 // pred_check
      _
    $region31: #{tpu_custom_call.1} parent=1 // pred_check_branch
      %77 = sbr.rel (0) target = $region33
    $region32: #{tpu_custom_call.1} parent=1 // pred_region
      %s79 = ssub.s32 512, 512
      %80 = vsyncadd [#allocation8], %s79
      %s81 = sshll.u32 [#allocation7], 4
      %s82 = int_to_ptr.vmem [resolvable:$true] %s81
      %87 = dma.hbm_to_vmem [thread:$0]  %s7, 512, %s82, [#allocation8], 64, 64, 4
    $region33: #{tpu_custom_call.1} parent=1 // pred_fallthru
      _
    // Predicated region
    $region34: #{tpu_custom_call.1} parent=1 // pred_check
      _
    $region35: #{tpu_custom_call.1} parent=1 // pred_check_branch
      %89 = sbr.rel (0) target = $region37
    $region36: #{tpu_custom_call.1} parent=1 // pred_region
      %s91 = ssub.s32 32, 32
      %92 = vsyncadd [#allocation8], %s91
      %s93 = sshll.u32 [#allocation9], 4
      %s94 = int_to_ptr.vmem [resolvable:$true] %s93
      %99 = dma.hbm_to_vmem [thread:$0]  %s8, 32, %s94, [#allocation8], 16, 16, 1
    $region37: #{tpu_custom_call.1} parent=1 // pred_fallthru
      _
    // Predicated region
    $region38: #{tpu_custom_call.1} parent=1 // pred_check
      _
    $region39: #{tpu_custom_call.1} parent=1 // pred_check_branch
      %101 = sbr.rel (0) target = $region41
    $region40: #{tpu_custom_call.1} parent=1 // pred_region
      %s103 = ssub.s32 512, 512
      %104 = vsyncadd [#allocation11], %s103
      %s105 = sshll.u32 [#allocation10], 4
      %s106 = int_to_ptr.vmem [resolvable:$true] %s105
      %111 = dma.hbm_to_vmem [thread:$0]  %s9, 512, %s106, [#allocation11], 64, 64, 4
    $region41: #{tpu_custom_call.1} parent=1 // pred_fallthru
      _
    // Predicated region
    $region42: #{tpu_custom_call.1} parent=1 // pred_check
      _
    $region43: #{tpu_custom_call.1} parent=1 // pred_check_branch
      %113 = sbr.rel (0) target = $region45
    $region44: #{tpu_custom_call.1} parent=1 // pred_region
      %s115 = ssub.s32 32, 32
      %116 = vsyncadd [#allocation11], %s115
      %s117 = sshll.u32 [#allocation12], 4
      %s118 = int_to_ptr.vmem [resolvable:$true] %s117
      %123 = dma.hbm_to_vmem [thread:$0]  %s10, 32, %s118, [#allocation11], 16, 16, 1
    $region45: #{tpu_custom_call.1} parent=1 // pred_fallthru
      _
    // Predicated region
    $region46: #{tpu_custom_call.1} parent=1 // pred_check
      _
    $region47: #{tpu_custom_call.1} parent=1 // pred_check_branch
      %125 = sbr.rel (0) target = $region49
    $region48: #{tpu_custom_call.1} parent=1 // pred_region
      _
    $region49: #{tpu_custom_call.1} parent=1 // pred_fallthru
      _
    // Predicated region
    $region50: #{tpu_custom_call.1} parent=1 // pred_check
      _
    $region51: #{tpu_custom_call.1} parent=1 // pred_check_branch
      %127 = sbr.rel (0) target = $region53
    $region52: #{tpu_custom_call.1} parent=1 // pred_region
      %s129 = ssub.s32 16, 16
      %130 = vsyncadd [#allocation14], %s129
      %s132 = sshll.u32 [#allocation13], 4
      %s133 = int_to_ptr.vmem [resolvable:$true] %s132
      %135 = dma.hbm_to_vmem [thread:$0]  %s12, 16, %s133, [#allocation14]
    $region53: #{tpu_custom_call.1} parent=1 // pred_fallthru
      _
    // Predicated region
    $region54: #{tpu_custom_call.1} parent=1 // pred_check
      _
    $region55: #{tpu_custom_call.1} parent=1 // pred_check_branch
      %137 = sbr.rel (0) target = $region57
    $region56: #{tpu_custom_call.1} parent=1 // pred_region
      _
    $region57: #{tpu_custom_call.1} parent=1 // pred_fallthru
      _
    // Predicated region
    $region58: #{tpu_custom_call.1} parent=1 // pred_check
      _
    $region59: #{tpu_custom_call.1} parent=1 // pred_check_branch
      %139 = sbr.rel (0) target = $region61
    $region60: #{tpu_custom_call.1} parent=1 // pred_region
      %s141 = ssub.s32 16, 16
      %142 = vsyncadd [#allocation14], %s141
      %s144 = sshll.u32 [#allocation15], 4
      %s145 = int_to_ptr.vmem [resolvable:$true] %s144
      %147 = dma.hbm_to_vmem [thread:$0]  %s14, 16, %s145, [#allocation14]
    $region61: #{tpu_custom_call.1} parent=1 // pred_fallthru
      _
    // Predicated region
    $region62: #{tpu_custom_call.1} parent=1 // pred_check
      _
    $region63: #{tpu_custom_call.1} parent=1 // pred_check_branch
      %149 = sbr.rel (0) target = $region65
    $region64: #{tpu_custom_call.1} parent=1 // pred_region
      %s151 = ssub.s32 256, 256
      %152 = vsyncadd [#allocation17], %s151
      %s153 = sshll.u32 [#allocation16], 4
      %s154 = int_to_ptr.vmem [resolvable:$true] %s153
      %159 = dma.hbm_to_vmem [thread:$0]  %s15, 256, %s154, [#allocation17], 64, 64, 4
    $region65: #{tpu_custom_call.1} parent=1 // pred_fallthru
      _
    // Predicated region
    $region66: #{tpu_custom_call.1} parent=1 // pred_check
      _
    $region67: #{tpu_custom_call.1} parent=1 // pred_check_branch
      %161 = sbr.rel (0) target = $region69
    $region68: #{tpu_custom_call.1} parent=1 // pred_region
      %s163 = ssub.s32 16, 16
      %164 = vsyncadd [#allocation17], %s163
      %s166 = sshll.u32 [#allocation18], 4
      %s167 = int_to_ptr.vmem [resolvable:$true] %s166
      %169 = dma.hbm_to_vmem [thread:$0]  %s16, 16, %s167, [#allocation17]
    $region69: #{tpu_custom_call.1} parent=1 // pred_fallthru
      _
    // Predicated region
    $region70: #{tpu_custom_call.1} parent=1 // pred_check
      _
    $region71: #{tpu_custom_call.1} parent=1 // pred_check_branch
      %171 = sbr.rel (0) target = $region73
    $region72: #{tpu_custom_call.1} parent=1 // pred_region
      %s173 = ssub.s32 16, 16
      %174 = vsyncadd [#allocation20], %s173
      %s176 = sshll.u32 [#allocation19], 4
      %s177 = int_to_ptr.vmem [resolvable:$true] %s176
      %179 = dma.hbm_to_vmem [thread:$0]  %s17, 16, %s177, [#allocation20]
    $region73: #{tpu_custom_call.1} parent=1 // pred_fallthru
      _
    // Predicated region
    $region74: #{tpu_custom_call.1} parent=1 // pred_check
      _
    $region75: #{tpu_custom_call.1} parent=1 // pred_check_branch
      %181 = sbr.rel (0) target = $region77
    $region76: #{tpu_custom_call.1} parent=1 // pred_region
      %s183 = ssub.s32 16, 16
      %184 = vsyncadd [#allocation20], %s183
      %s186 = sshll.u32 [#allocation21], 4
      %s187 = int_to_ptr.vmem [resolvable:$true] %s186
      %189 = dma.hbm_to_vmem [thread:$0]  %s18, 16, %s187, [#allocation20]
    $region77: #{tpu_custom_call.1} parent=1 // pred_fallthru
      _
    // Predicated region
    $region78: #{tpu_custom_call.1} parent=1 // pred_check
      _
    $region79: #{tpu_custom_call.1} parent=1 // pred_check_branch
      %191 = sbr.rel (0) target = $region81
    $region80: #{tpu_custom_call.1} parent=1 // pred_region
      %s193 = ssub.s32 256, 256
      %194 = vsyncadd [#allocation23], %s193
      %s195 = sshll.u32 [#allocation22], 4
      %s196 = int_to_ptr.vmem [resolvable:$true] %s195
      %201 = dma.hbm_to_vmem [thread:$0]  %s19, 256, %s196, [#allocation23], 64, 64, 4
    $region81: #{tpu_custom_call.1} parent=1 // pred_fallthru
      _
    // Predicated region
    $region82: #{tpu_custom_call.1} parent=1 // pred_check
      _
    $region83: #{tpu_custom_call.1} parent=1 // pred_check_branch
      %203 = sbr.rel (0) target = $region85
    $region84: #{tpu_custom_call.1} parent=1 // pred_region
      %s205 = ssub.s32 16, 16
      %206 = vsyncadd [#allocation23], %s205
      %s208 = sshll.u32 [#allocation24], 4
      %s209 = int_to_ptr.vmem [resolvable:$true] %s208
      %211 = dma.hbm_to_vmem [thread:$0]  %s20, 16, %s209, [#allocation23]
    $region85: #{tpu_custom_call.1} parent=1 // pred_fallthru
      _
    // Predicated region
    $region86: #{tpu_custom_call.1} parent=1 // pred_check
      _
    $region87: #{tpu_custom_call.1} parent=1 // pred_check_branch
      %213 = sbr.rel (0) target = $region89
    $region88: #{tpu_custom_call.1} parent=1 // pred_region
      _
    $region89: #{tpu_custom_call.1} parent=1 // pred_fallthru
      _
    // Predicated region
    $region90: #{tpu_custom_call.1} parent=1 // pred_check
      _
    $region91: #{tpu_custom_call.1} parent=1 // pred_check_branch
      %215 = sbr.rel (0) target = $region93
    $region92: #{tpu_custom_call.1} parent=1 // pred_region
      _
    $region93: #{tpu_custom_call.1} parent=1 // pred_fallthru
      _
    // Predicated region
    $region94: #{tpu_custom_call.1} parent=1 // pred_check
      _
    $region95: #{tpu_custom_call.1} parent=1 // pred_check_branch
      %217 = sbr.rel (0) target = $region97
    $region96: #{tpu_custom_call.1} parent=1 // pred_region
      %218 = dma.done [#allocation3], 64
    $region97: #{tpu_custom_call.1} parent=1 // pred_fallthru
      _
    // Predicated region
    $region98: #{tpu_custom_call.1} parent=1 // pred_check
      _
    $region99: #{tpu_custom_call.1} parent=1 // pred_check_branch
      %220 = sbr.rel (0) target = $region101
    $region100: #{tpu_custom_call.1} parent=1 // pred_region
      %221 = dma.done [#allocation5], 128
    $region101: #{tpu_custom_call.1} parent=1 // pred_fallthru
      _
    // Predicated region
    $region102: #{tpu_custom_call.1} parent=1 // pred_check
      _
    $region103: #{tpu_custom_call.1} parent=1 // pred_check_branch
      %223 = sbr.rel (0) target = $region105
    $region104: #{tpu_custom_call.1} parent=1 // pred_region
      %224 = dma.done [#allocation5], 128
    $region105: #{tpu_custom_call.1} parent=1 // pred_fallthru
      _
    // Predicated region
    $region106: #{tpu_custom_call.1} parent=1 // pred_check
      _
    $region107: #{tpu_custom_call.1} parent=1 // pred_check_branch
      %226 = sbr.rel (0) target = $region109
    $region108: #{tpu_custom_call.1} parent=1 // pred_region
      %227 = dma.done [#allocation8], 512
    $region109: #{tpu_custom_call.1} parent=1 // pred_fallthru
      _
    // Predicated region
    $region110: #{tpu_custom_call.1} parent=1 // pred_check
      _
    $region111: #{tpu_custom_call.1} parent=1 // pred_check_branch
      %229 = sbr.rel (0) target = $region113
    $region112: #{tpu_custom_call.1} parent=1 // pred_region
      %230 = dma.done [#allocation8], 32
    $region113: #{tpu_custom_call.1} parent=1 // pred_fallthru
      _
    // Predicated region
    $region114: #{tpu_custom_call.1} parent=1 // pred_check
      _
    $region115: #{tpu_custom_call.1} parent=1 // pred_check_branch
      %232 = sbr.rel (0) target = $region117
    $region116: #{tpu_custom_call.1} parent=1 // pred_region
      %233 = dma.done [#allocation11], 512
    $region117: #{tpu_custom_call.1} parent=1 // pred_fallthru
      _
    // Predicated region
    $region118: #{tpu_custom_call.1} parent=1 // pred_check
      _
    $region119: #{tpu_custom_call.1} parent=1 // pred_check_branch
      %235 = sbr.rel (0) target = $region121
    $region120: #{tpu_custom_call.1} parent=1 // pred_region
      %236 = dma.done [#allocation11], 32
    $region121: #{tpu_custom_call.1} parent=1 // pred_fallthru
      _
    // Predicated region
    $region122: #{tpu_custom_call.1} parent=1 // pred_check
      _
    $region123: #{tpu_custom_call.1} parent=1 // pred_check_branch
      %238 = sbr.rel (0) target = $region125
    $region124: #{tpu_custom_call.1} parent=1 // pred_region
      %239 = dma.done [#allocation14], 16
    $region125: #{tpu_custom_call.1} parent=1 // pred_fallthru
      _
    // Predicated region
    $region126: #{tpu_custom_call.1} parent=1 // pred_check
      _
    $region127: #{tpu_custom_call.1} parent=1 // pred_check_branch
      %241 = sbr.rel (0) target = $region129
    $region128: #{tpu_custom_call.1} parent=1 // pred_region
      %242 = dma.done [#allocation14], 16
    $region129: #{tpu_custom_call.1} parent=1 // pred_fallthru
      _
    // Predicated region
    $region130: #{tpu_custom_call.1} parent=1 // pred_check
      _
    $region131: #{tpu_custom_call.1} parent=1 // pred_check_branch
      %244 = sbr.rel (0) target = $region133
    $region132: #{tpu_custom_call.1} parent=1 // pred_region
      %245 = dma.done [#allocation17], 256
    $region133: #{tpu_custom_call.1} parent=1 // pred_fallthru
      _
    // Predicated region
    $region134: #{tpu_custom_call.1} parent=1 // pred_check
      _
    $region135: #{tpu_custom_call.1} parent=1 // pred_check_branch
      %247 = sbr.rel (0) target = $region137
    $region136: #{tpu_custom_call.1} parent=1 // pred_region
      %248 = dma.done [#allocation17], 16
    $region137: #{tpu_custom_call.1} parent=1 // pred_fallthru
      _
    // Predicated region
    $region138: #{tpu_custom_call.1} parent=1 // pred_check
      _
    $region139: #{tpu_custom_call.1} parent=1 // pred_check_branch
      %250 = sbr.rel (0) target = $region141
    $region140: #{tpu_custom_call.1} parent=1 // pred_region
      %251 = dma.done [#allocation20], 16
    $region141: #{tpu_custom_call.1} parent=1 // pred_fallthru
      _
    // Predicated region
    $region142: #{tpu_custom_call.1} parent=1 // pred_check
      _
    $region143: #{tpu_custom_call.1} parent=1 // pred_check_branch
      %253 = sbr.rel (0) target = $region145
    $region144: #{tpu_custom_call.1} parent=1 // pred_region
      %254 = dma.done [#allocation20], 16
    $region145: #{tpu_custom_call.1} parent=1 // pred_fallthru
      _
    // Predicated region
    $region146: #{tpu_custom_call.1} parent=1 // pred_check
      _
    $region147: #{tpu_custom_call.1} parent=1 // pred_check_branch
      %256 = sbr.rel (0) target = $region149
    $region148: #{tpu_custom_call.1} parent=1 // pred_region
      %257 = dma.done [#allocation23], 256
    $region149: #{tpu_custom_call.1} parent=1 // pred_fallthru
      _
    // Predicated region
    $region150: #{tpu_custom_call.1} parent=1 // pred_check
      _
    $region151: #{tpu_custom_call.1} parent=1 // pred_check_branch
      %259 = sbr.rel (0) target = $region153
    $region152: #{tpu_custom_call.1} parent=1 // pred_region
      %260 = dma.done [#allocation23], 16
    $region153: #{tpu_custom_call.1} parent=1 // pred_fallthru
      _
    %v262 = vld [vmem:[%s2] sm:$0xf]
    %v263 = vld [vmem:[%s2 + $0x4] sm:$0x1]
    %v264 = vld [vmem:[%s3] sm:$0xf]
    %v265 = vld [vmem:[%s3 + $0x4] sm:$0x1]
    %v266 = vld [vmem:[#allocation4] sm:$0xf]
    %v267 = vld [vmem:[#allocation4 + $0x4] sm:$0x1]
    %v268 = vld [vmem:[%s5] sm:$0xf]
    %v269 = vld [vmem:[%s5 + $0x4] sm:$0xf]
    %v270 = vld [vmem:[%s5 + $0x8] sm:$0xf]
    %v271 = vld [vmem:[%s5 + $0xc] sm:$0xf]
    %v272 = vld [vmem:[#allocation2] sm:$0xf]
    %v273 = vld [vmem:[%s6] sm:$0xf]
    %v274 = vld [vmem:[%s6 + $0x4] sm:$0xf]
    %v275 = vld [vmem:[%s6 + $0x8] sm:$0xf]
    %v276 = vld [vmem:[%s6 + $0xc] sm:$0xf]
    %v281 = vunpack.c.l.b16 %v273
    %v282 = vunpack.c.l.b16 %v274
    %v283 = vunpack.c.l.b16 %v275
    %v284 = vunpack.c.l.b16 %v276
    %v285 = vpack.c.b16 %v282, %v281
    %v286 = vpack.c.b16 %v284, %v283
    %vm289 = vcmask 261120
    %v291 = vsel %vm289, %v272, 0
    %293 = vmatprep.subr.bf16.mxu0 0
    %294 = vmatpush1.bf16.msra.mxu0 0
    %295 = vmatprep.subr.bf16.mxu0 0
    %296 = vmatpush1.bf16.msra.mxu0 0
    %297 = vmatprep.subr.bf16.mxu0 0
    %298 = vmatpush1.bf16.msra.mxu0 0
    %299 = vmatprep.subr.bf16.mxu0 0
    %300 = vmatpush1.bf16.msra.mxu0 0
    %301 = vmatprep.subr.bf16.mxu0 0
    %302 = vmatpush1.bf16.msra.mxu0 0
    %303 = vmatprep.subr.bf16.mxu0 0
    %304 = vmatpush1.bf16.msra.mxu0 0
    %305 = vmatprep.subr.bf16.mxu0 0
    %306 = vmatpush1.bf16.msra.mxu0 %v286
    %307 = vmatprep.subr.bf16.mxu0 0
    %308 = vmatpush1.bf16.msra.mxu0 %v285
    %309 = vmatprep.subr.bf16.mxu0 0
    %310 = vmatpush2.bf16.msra.mxu0 0
    %311 = vmatprep.subr.bf16.mxu0 0
    %312 = vmatpush2.bf16.msra.mxu0 0
    %313 = vmatprep.subr.bf16.mxu0 0
    %314 = vmatpush2.bf16.msra.mxu0 0
    %315 = vmatprep.subr.bf16.mxu0 0
    %316 = vmatpush2.bf16.msra.mxu0 0
    %317 = vmatprep.subr.bf16.mxu0 0
    %318 = vmatpush2.bf16.msra.mxu0 0
    %319 = vmatprep.subr.bf16.mxu0 0
    %320 = vmatpush2.bf16.msra.mxu0 0
    %321 = vmatprep.subr.bf16.mxu0 0
    %322 = vmatpush2.bf16.msra.mxu0 0
    %323 = vmatprep.subr.bf16.mxu0 0
    %324 = vmatpush2.bf16.msra.mxu0 0
    %325 = vmatprep.mubr.bf16.mxu0 0
    %326 = vmatmul.mubr.bf16.gmra.mxu0 %v291
    %v327 = vpop.f32.mrf.mxu0
    %v328 = vadd.f32 0.0, %v327
    %v329 = vpop.f32.mrf.mxu0
    %v330 = vpop.f32.mrf.mxu0
    %v331 = vpop.f32.mrf.mxu0
    %332 = vdwg.mxu0
    %v333 = vpack.c.bf16 %v328, %v328
    %v334 = vld [vmem:[#allocation7] sm:$0xf]
    %v335 = vld [vmem:[#allocation7 + $0x4] sm:$0xf]
    %v336 = vld [vmem:[#allocation7 + $0x8] sm:$0xf]
    %v337 = vld [vmem:[#allocation7 + $0xc] sm:$0xf]
    %v340 = vunpack.c.l.b16 %v266
    %v341 = vunpack.c.l.b16 %v267
    %v342 = vpack.c.b16 %v341, %v340
    %v347 = vunpack.c.l.b16 %v334
    %v348 = vunpack.c.l.b16 %v335
    %v349 = vunpack.c.l.b16 %v336
    %v350 = vunpack.c.l.b16 %v337
    %v351 = vpack.c.b16 %v348, %v347
    %v352 = vpack.c.b16 %v350, %v349
    %v356 = vsel %vm289, %v342, 0
    %358 = vmatprep.subr.bf16.mxu0 0
    %359 = vmatpush1.bf16.msra.mxu0 0
    %360 = vmatprep.subr.bf16.mxu0 0
    %361 = vmatpush1.bf16.msra.mxu0 0
    %362 = vmatprep.subr.bf16.mxu0 0
    %363 = vmatpush1.bf16.msra.mxu0 0
    %364 = vmatprep.subr.bf16.mxu0 0
    %365 = vmatpush1.bf16.msra.mxu0 0
    %366 = vmatprep.subr.bf16.mxu0 0
    %367 = vmatpush1.bf16.msra.mxu0 0
    %368 = vmatprep.subr.bf16.mxu0 0
    %369 = vmatpush1.bf16.msra.mxu0 0
    %370 = vmatprep.subr.bf16.mxu0 0
    %371 = vmatpush1.bf16.msra.mxu0 %v352
    %372 = vmatprep.subr.bf16.mxu0 0
    %373 = vmatpush1.bf16.msra.mxu0 %v351
    %374 = vmatprep.subr.bf16.mxu0 0
    %375 = vmatpush2.bf16.msra.mxu0 0
    %376 = vmatprep.subr.bf16.mxu0 0
    %377 = vmatpush2.bf16.msra.mxu0 0
    %378 = vmatprep.subr.bf16.mxu0 0
    %379 = vmatpush2.bf16.msra.mxu0 0
    %380 = vmatprep.subr.bf16.mxu0 0
    %381 = vmatpush2.bf16.msra.mxu0 0
    %382 = vmatprep.subr.bf16.mxu0 0
    %383 = vmatpush2.bf16.msra.mxu0 0
    %384 = vmatprep.subr.bf16.mxu0 0
    %385 = vmatpush2.bf16.msra.mxu0 0
    %386 = vmatprep.subr.bf16.mxu0 0
    %387 = vmatpush2.bf16.msra.mxu0 0
    %388 = vmatprep.subr.bf16.mxu0 0
    %389 = vmatpush2.bf16.msra.mxu0 0
    %390 = vmatprep.mubr.bf16.mxu0 0
    %391 = vmatmul.mubr.bf16.gmra.mxu0 %v356
    %v392 = vpop.f32.mrf.mxu0
    %v393 = vadd.f32 0.0, %v392
    %v394 = vpop.f32.mrf.mxu0
    %v395 = vpop.f32.mrf.mxu0
    %v396 = vadd.f32 0.0, %v395
    %v397 = vpop.f32.mrf.mxu0
    %398 = vdwg.mxu0
    %v401 = vunpack.c.l.b16 %v262
    %v402 = vunpack.c.l.b16 %v263
    %v403 = vpack.c.b16 %v402, %v401
    %vm404 = vcmask 64512
    %v406 = vsel %vm404, %v403, 0
    %vm408 = vcmask 1043456
    %v410 = vsel %vm408, %v333, 0
    %412 = vmatprep.subr.bf16.mxu0 0
    %413 = vmatpush1.bf16.msra.mxu0 0
    %414 = vmatprep.subr.bf16.mxu0 0
    %415 = vmatpush1.bf16.msra.mxu0 0
    %416 = vmatprep.subr.bf16.mxu0 0
    %417 = vmatpush1.bf16.msra.mxu0 0
    %418 = vmatprep.subr.bf16.mxu0 0
    %419 = vmatpush1.bf16.msra.mxu0 0
    %420 = vmatprep.subr.bf16.mxu0 0
    %421 = vmatpush1.bf16.msra.mxu0 0
    %422 = vmatprep.subr.bf16.mxu0 0
    %423 = vmatpush1.bf16.msra.mxu0 0
    %424 = vmatprep.subr.bf16.mxu0 0
    %425 = vmatpush1.bf16.msra.mxu0 0
    %426 = vmatprep.subr.bf16.mxu0 0
    %427 = vmatpush1.bf16.msra.mxu0 %v410
    %428 = vmatprep.subr.bf16.mxu0 0
    %429 = vmatpush2.bf16.msra.mxu0 0
    %430 = vmatprep.subr.bf16.mxu0 0
    %431 = vmatpush2.bf16.msra.mxu0 0
    %432 = vmatprep.subr.bf16.mxu0 0
    %433 = vmatpush2.bf16.msra.mxu0 0
    %434 = vmatprep.subr.bf16.mxu0 0
    %435 = vmatpush2.bf16.msra.mxu0 0
    %436 = vmatprep.subr.bf16.mxu0 0
    %437 = vmatpush2.bf16.msra.mxu0 0
    %438 = vmatprep.subr.bf16.mxu0 0
    %439 = vmatpush2.bf16.msra.mxu0 0
    %440 = vmatprep.subr.bf16.mxu0 0
    %441 = vmatpush2.bf16.msra.mxu0 0
    %442 = vmatprep.subr.bf16.mxu0 0
    %443 = vmatpush2.bf16.msra.mxu0 0
    %444 = vmatprep.mubr.bf16.mxu0 0
    %445 = vmatmul.mubr.bf16.gmra.mxu0 %v406
    %v446 = vpop.f32.mrf.mxu0
    %v447 = vadd.f32 %v393, %v446
    %v448 = vpop.f32.mrf.mxu0
    %v449 = vpop.f32.mrf.mxu0
    %v450 = vadd.f32 %v396, %v449
    %v451 = vpop.f32.mrf.mxu0
    %452 = vdwg.mxu0
    %v453 = vld [vmem:[#allocation9] sm:$0x1]
    %v455 = vlaneseq
    %v456 = vshrl.u32 %v455, 7
    %v457 = vsub.s32 0, %v456
    %v458 = vrot.slane %v453, %v457
    %v460 = vadd.f32 %v447, %v458
    %v461 = vadd.f32 %v450, %v458
    %vm462 = vcmp.ge.f32.partialorder %v460, 0.0
    %vm463 = vcmp.ge.f32.partialorder %v461, 0.0
    %v464 = vmul.f32 %v460, 0.01
    %v465 = vmul.f32 %v461, 0.01
    %v466 = vsel %vm462, %v460, %v464
    %v467 = vsel %vm463, %v461, %v465
    %v468 = vpack.c.bf16 %v467, %v466
    %v471 = vunpack.c.l.b16 %v264
    %v472 = vunpack.c.l.b16 %v265
    %v473 = vpack.c.b16 %v472, %v471
    %475 = vxpose.xlu0.c.b16.start [1/8] %v473, 128
    %476 = vxpose.xlu0.c.b16.cont [2/8] 0, 128
    %477 = vxpose.xlu0.c.b16.cont [3/8] 0, 128
    %478 = vxpose.xlu0.c.b16.cont [4/8] 0, 128
    %479 = vxpose.xlu0.c.b16.cont [5/8] 0, 128
    %480 = vxpose.xlu0.c.b16.cont [6/8] 0, 128
    %481 = vxpose.xlu0.c.b16.cont [7/8] 0, 128
    %482 = vxpose.xlu0.c.b16.end [8/8] 0, 128
    %v483 = vpop.trf.xlu0
    %v484 = vpop.trf.xlu0
    %v485 = vpop.trf.xlu0
    %v486 = vpop.trf.xlu0
    %v487 = vpop.trf.xlu0
    %v488 = vpop.trf.xlu0
    %v489 = vpop.trf.xlu0
    %v490 = vpop.trf.xlu0
    %vm491 = vcmask 80896
    %v493 = vsel %vm491, %v483, 0
    %vm495 = vcmask 1044480
    %v497 = vsel %vm495, %v468, 0
    %499 = vmatprep.subr.bf16.mxu0 0
    %500 = vmatpush1.bf16.msra.mxu0 0
    %501 = vmatprep.subr.bf16.mxu0 0
    %502 = vmatpush1.bf16.msra.mxu0 0
    %503 = vmatprep.subr.bf16.mxu0 0
    %504 = vmatpush1.bf16.msra.mxu0 0
    %505 = vmatprep.subr.bf16.mxu0 0
    %506 = vmatpush1.bf16.msra.mxu0 0
    %507 = vmatprep.subr.bf16.mxu0 0
    %508 = vmatpush1.bf16.msra.mxu0 0
    %509 = vmatprep.subr.bf16.mxu0 0
    %510 = vmatpush1.bf16.msra.mxu0 0
    %511 = vmatprep.subr.bf16.mxu0 0
    %512 = vmatpush1.bf16.msra.mxu0 0
    %513 = vmatprep.subr.bf16.mxu0 0
    %514 = vmatpush1.bf16.msra.mxu0 %v497
    %515 = vmatprep.subr.bf16.mxu0 0
    %516 = vmatpush2.bf16.msra.mxu0 0
    %517 = vmatprep.subr.bf16.mxu0 0
    %518 = vmatpush2.bf16.msra.mxu0 0
    %519 = vmatprep.subr.bf16.mxu0 0
    %520 = vmatpush2.bf16.msra.mxu0 0
    %521 = vmatprep.subr.bf16.mxu0 0
    %522 = vmatpush2.bf16.msra.mxu0 0
    %523 = vmatprep.subr.bf16.mxu0 0
    %524 = vmatpush2.bf16.msra.mxu0 0
    %525 = vmatprep.subr.bf16.mxu0 0
    %526 = vmatpush2.bf16.msra.mxu0 0
    %527 = vmatprep.subr.bf16.mxu0 0
    %528 = vmatpush2.bf16.msra.mxu0 0
    %529 = vmatprep.subr.bf16.mxu0 0
    %530 = vmatpush2.bf16.msra.mxu0 0
    %531 = vmatprep.mubr.bf16.mxu0 0
    %532 = vmatmul.mubr.bf16.gmra.mxu0 %v493
    %v533 = vpop.f32.mrf.mxu0
    %v534 = vadd.f32 0.0, %v533
    %v535 = vpop.f32.mrf.mxu0
    %v536 = vpop.f32.mrf.mxu0
    %v537 = vpop.f32.mrf.mxu0
    %538 = vdwg.mxu0
    %v539 = vld [vmem:[#allocation10] sm:$0xf]
    %v540 = vld [vmem:[#allocation10 + $0x4] sm:$0xf]
    %v541 = vld [vmem:[#allocation10 + $0x8] sm:$0xf]
    %v542 = vld [vmem:[#allocation10 + $0xc] sm:$0xf]
    %v543 = vld [vmem:[#allocation12] sm:$0x1]
    %v545 = vlaneseq
    %v546 = vshrl.u32 %v545, 7
    %v547 = vsub.s32 0, %v546
    %v548 = vrot.slane %v543, %v547
    %v554 = vunpack.c.l.b16 %v539
    %v555 = vunpack.c.l.b16 %v540
    %v556 = vunpack.c.l.b16 %v541
    %v557 = vunpack.c.l.b16 %v542
    %v558 = vpack.c.b16 %v555, %v554
    %v559 = vpack.c.b16 %v557, %v556
    %562 = vmatprep.subr.bf16.mxu0 0
    %563 = vmatpush1.bf16.msra.mxu0 0
    %564 = vmatprep.subr.bf16.mxu0 0
    %565 = vmatpush1.bf16.msra.mxu0 0
    %566 = vmatprep.subr.bf16.mxu0 0
    %567 = vmatpush1.bf16.msra.mxu0 0
    %568 = vmatprep.subr.bf16.mxu0 0
    %569 = vmatpush1.bf16.msra.mxu0 0
    %570 = vmatprep.subr.bf16.mxu0 0
    %571 = vmatpush1.bf16.msra.mxu0 0
    %572 = vmatprep.subr.bf16.mxu0 0
    %573 = vmatpush1.bf16.msra.mxu0 0
    %574 = vmatprep.subr.bf16.mxu0 0
    %575 = vmatpush1.bf16.msra.mxu0 %v559
    %576 = vmatprep.subr.bf16.mxu0 0
    %577 = vmatpush1.bf16.msra.mxu0 %v558
    %578 = vmatprep.subr.bf16.mxu0 0
    %579 = vmatpush2.bf16.msra.mxu0 0
    %580 = vmatprep.subr.bf16.mxu0 0
    %581 = vmatpush2.bf16.msra.mxu0 0
    %582 = vmatprep.subr.bf16.mxu0 0
    %583 = vmatpush2.bf16.msra.mxu0 0
    %584 = vmatprep.subr.bf16.mxu0 0
    %585 = vmatpush2.bf16.msra.mxu0 0
    %586 = vmatprep.subr.bf16.mxu0 0
    %587 = vmatpush2.bf16.msra.mxu0 0
    %588 = vmatprep.subr.bf16.mxu0 0
    %589 = vmatpush2.bf16.msra.mxu0 0
    %590 = vmatprep.subr.bf16.mxu0 0
    %591 = vmatpush2.bf16.msra.mxu0 0
    %592 = vmatprep.subr.bf16.mxu0 0
    %593 = vmatpush2.bf16.msra.mxu0 0
    %594 = vmatprep.mubr.bf16.mxu0 0
    %595 = vmatmul.mubr.bf16.gmra.mxu0 %v291
    %v596 = vpop.f32.mrf.mxu0
    %v597 = vadd.f32 %v548, %v596
    %v598 = vpop.f32.mrf.mxu0
    %v599 = vpop.f32.mrf.mxu0
    %v600 = vpop.f32.mrf.mxu0
    %601 = vdwg.mxu0
    %v602 = vadd.f32 %v597, %v534
    %vm603 = vcmp.ge.f32.partialorder %v602, 0.0
    %v604 = vmul.f32 %v602, 0.01
    %v605 = vsel %vm603, %v602, %v604
    %v606 = vpack.c.bf16 %v605, %v605
    %s607 = scalar_lea.vmem %s6, 16
    %v608 = vld [vmem:[%s607] sm:$0xf]
    %v609 = vld [vmem:[%s607 + $0x4] sm:$0xf]
    %v610 = vld [vmem:[%s607 + $0x8] sm:$0xf]
    %v611 = vld [vmem:[%s607 + $0xc] sm:$0xf]
    %v616 = vunpack.c.l.b16 %v608
    %v617 = vunpack.c.l.b16 %v609
    %v618 = vunpack.c.l.b16 %v610
    %v619 = vunpack.c.l.b16 %v611
    %v620 = vpack.c.b16 %v617, %v616
    %v621 = vpack.c.b16 %v619, %v618
    %v625 = vsel %vm289, %v606, 0
    %627 = vmatprep.subr.bf16.mxu0 0
    %628 = vmatpush1.bf16.msra.mxu0 0
    %629 = vmatprep.subr.bf16.mxu0 0
    %630 = vmatpush1.bf16.msra.mxu0 0
    %631 = vmatprep.subr.bf16.mxu0 0
    %632 = vmatpush1.bf16.msra.mxu0 0
    %633 = vmatprep.subr.bf16.mxu0 0
    %634 = vmatpush1.bf16.msra.mxu0 0
    %635 = vmatprep.subr.bf16.mxu0 0
    %636 = vmatpush1.bf16.msra.mxu0 0
    %637 = vmatprep.subr.bf16.mxu0 0
    %638 = vmatpush1.bf16.msra.mxu0 0
    %639 = vmatprep.subr.bf16.mxu0 0
    %640 = vmatpush1.bf16.msra.mxu0 %v621
    %641 = vmatprep.subr.bf16.mxu0 0
    %642 = vmatpush1.bf16.msra.mxu0 %v620
    %643 = vmatprep.subr.bf16.mxu0 0
    %644 = vmatpush2.bf16.msra.mxu0 0
    %645 = vmatprep.subr.bf16.mxu0 0
    %646 = vmatpush2.bf16.msra.mxu0 0
    %647 = vmatprep.subr.bf16.mxu0 0
    %648 = vmatpush2.bf16.msra.mxu0 0
    %649 = vmatprep.subr.bf16.mxu0 0
    %650 = vmatpush2.bf16.msra.mxu0 0
    %651 = vmatprep.subr.bf16.mxu0 0
    %652 = vmatpush2.bf16.msra.mxu0 0
    %653 = vmatprep.subr.bf16.mxu0 0
    %654 = vmatpush2.bf16.msra.mxu0 0
    %655 = vmatprep.subr.bf16.mxu0 0
    %656 = vmatpush2.bf16.msra.mxu0 0
    %657 = vmatprep.subr.bf16.mxu0 0
    %658 = vmatpush2.bf16.msra.mxu0 0
    %659 = vmatprep.mubr.bf16.mxu0 0
    %660 = vmatmul.mubr.bf16.gmra.mxu0 %v625
    %v661 = vpop.f32.mrf.mxu0
    %v662 = vadd.f32 0.0, %v661
    %v663 = vpop.f32.mrf.mxu0
    %v664 = vpop.f32.mrf.mxu0
    %v665 = vpop.f32.mrf.mxu0
    %666 = vdwg.mxu0
    %v667 = vpack.c.bf16 %v662, %v662
    %s668 = scalar_lea.vmem [#allocation7], 16
    %v669 = vld [vmem:[%s668] sm:$0xf]
    %v670 = vld [vmem:[%s668 + $0x4] sm:$0xf]
    %v671 = vld [vmem:[%s668 + $0x8] sm:$0xf]
    %v672 = vld [vmem:[%s668 + $0xc] sm:$0xf]
    %v677 = vunpack.c.l.b16 %v669
    %v678 = vunpack.c.l.b16 %v670
    %v679 = vunpack.c.l.b16 %v671
    %v680 = vunpack.c.l.b16 %v672
    %v681 = vpack.c.b16 %v678, %v677
    %v682 = vpack.c.b16 %v680, %v679
    %685 = vmatprep.subr.bf16.mxu0 0
    %686 = vmatpush1.bf16.msra.mxu0 0
    %687 = vmatprep.subr.bf16.mxu0 0
    %688 = vmatpush1.bf16.msra.mxu0 0
    %689 = vmatprep.subr.bf16.mxu0 0
    %690 = vmatpush1.bf16.msra.mxu0 0
    %691 = vmatprep.subr.bf16.mxu0 0
    %692 = vmatpush1.bf16.msra.mxu0 0
    %693 = vmatprep.subr.bf16.mxu0 0
    %694 = vmatpush1.bf16.msra.mxu0 0
    %695 = vmatprep.subr.bf16.mxu0 0
    %696 = vmatpush1.bf16.msra.mxu0 0
    %697 = vmatprep.subr.bf16.mxu0 0
    %698 = vmatpush1.bf16.msra.mxu0 %v682
    %699 = vmatprep.subr.bf16.mxu0 0
    %700 = vmatpush1.bf16.msra.mxu0 %v681
    %701 = vmatprep.subr.bf16.mxu0 0
    %702 = vmatpush2.bf16.msra.mxu0 0
    %703 = vmatprep.subr.bf16.mxu0 0
    %704 = vmatpush2.bf16.msra.mxu0 0
    %705 = vmatprep.subr.bf16.mxu0 0
    %706 = vmatpush2.bf16.msra.mxu0 0
    %707 = vmatprep.subr.bf16.mxu0 0
    %708 = vmatpush2.bf16.msra.mxu0 0
    %709 = vmatprep.subr.bf16.mxu0 0
    %710 = vmatpush2.bf16.msra.mxu0 0
    %711 = vmatprep.subr.bf16.mxu0 0
    %712 = vmatpush2.bf16.msra.mxu0 0
    %713 = vmatprep.subr.bf16.mxu0 0
    %714 = vmatpush2.bf16.msra.mxu0 0
    %715 = vmatprep.subr.bf16.mxu0 0
    %716 = vmatpush2.bf16.msra.mxu0 0
    %717 = vmatprep.mubr.bf16.mxu0 0
    %718 = vmatmul.mubr.bf16.gmra.mxu0 %v356
    %v719 = vpop.f32.mrf.mxu0
    %v720 = vadd.f32 0.0, %v719
    %v721 = vpop.f32.mrf.mxu0
    %v722 = vpop.f32.mrf.mxu0
    %v723 = vadd.f32 0.0, %v722
    %v724 = vpop.f32.mrf.mxu0
    %725 = vdwg.mxu0
    %v727 = vsel %vm408, %v667, 0
    %729 = vmatprep.subr.bf16.mxu0 0
    %730 = vmatpush1.bf16.msra.mxu0 0
    %731 = vmatprep.subr.bf16.mxu0 0
    %732 = vmatpush1.bf16.msra.mxu0 0
    %733 = vmatprep.subr.bf16.mxu0 0
    %734 = vmatpush1.bf16.msra.mxu0 0
    %735 = vmatprep.subr.bf16.mxu0 0
    %736 = vmatpush1.bf16.msra.mxu0 0
    %737 = vmatprep.subr.bf16.mxu0 0
    %738 = vmatpush1.bf16.msra.mxu0 0
    %739 = vmatprep.subr.bf16.mxu0 0
    %740 = vmatpush1.bf16.msra.mxu0 0
    %741 = vmatprep.subr.bf16.mxu0 0
    %742 = vmatpush1.bf16.msra.mxu0 0
    %743 = vmatprep.subr.bf16.mxu0 0
    %744 = vmatpush1.bf16.msra.mxu0 %v727
    %745 = vmatprep.subr.bf16.mxu0 0
    %746 = vmatpush2.bf16.msra.mxu0 0
    %747 = vmatprep.subr.bf16.mxu0 0
    %748 = vmatpush2.bf16.msra.mxu0 0
    %749 = vmatprep.subr.bf16.mxu0 0
    %750 = vmatpush2.bf16.msra.mxu0 0
    %751 = vmatprep.subr.bf16.mxu0 0
    %752 = vmatpush2.bf16.msra.mxu0 0
    %753 = vmatprep.subr.bf16.mxu0 0
    %754 = vmatpush2.bf16.msra.mxu0 0
    %755 = vmatprep.subr.bf16.mxu0 0
    %756 = vmatpush2.bf16.msra.mxu0 0
    %757 = vmatprep.subr.bf16.mxu0 0
    %758 = vmatpush2.bf16.msra.mxu0 0
    %759 = vmatprep.subr.bf16.mxu0 0
    %760 = vmatpush2.bf16.msra.mxu0 0
    %761 = vmatprep.mubr.bf16.mxu0 0
    %762 = vmatmul.mubr.bf16.gmra.mxu0 %v406
    %v763 = vpop.f32.mrf.mxu0
    %v764 = vadd.f32 %v720, %v763
    %v765 = vpop.f32.mrf.mxu0
    %v766 = vpop.f32.mrf.mxu0
    %v767 = vadd.f32 %v723, %v766
    %v768 = vpop.f32.mrf.mxu0
    %769 = vdwg.mxu0
    %s770 = scalar_lea.vmem [#allocation9], 1
    %v771 = vld [vmem:[%s770] sm:$0x1]
    %v773 = vlaneseq
    %v774 = vshrl.u32 %v773, 7
    %v775 = vsub.s32 0, %v774
    %v776 = vrot.slane %v771, %v775
    %v778 = vadd.f32 %v764, %v776
    %v779 = vadd.f32 %v767, %v776
    %vm780 = vcmp.ge.f32.partialorder %v778, 0.0
    %vm781 = vcmp.ge.f32.partialorder %v779, 0.0
    %v782 = vmul.f32 %v778, 0.01
    %v783 = vmul.f32 %v779, 0.01
    %v784 = vsel %vm780, %v778, %v782
    %v785 = vsel %vm781, %v779, %v783
    %v786 = vpack.c.bf16 %v785, %v784
    %v788 = vsel %vm495, %v786, 0
    %790 = vmatprep.subr.bf16.mxu0 0
    %791 = vmatpush1.bf16.msra.mxu0 0
    %792 = vmatprep.subr.bf16.mxu0 0
    %793 = vmatpush1.bf16.msra.mxu0 0
    %794 = vmatprep.subr.bf16.mxu0 0
    %795 = vmatpush1.bf16.msra.mxu0 0
    %796 = vmatprep.subr.bf16.mxu0 0
    %797 = vmatpush1.bf16.msra.mxu0 0
    %798 = vmatprep.subr.bf16.mxu0 0
    %799 = vmatpush1.bf16.msra.mxu0 0
    %800 = vmatprep.subr.bf16.mxu0 0
    %801 = vmatpush1.bf16.msra.mxu0 0
    %802 = vmatprep.subr.bf16.mxu0 0
    %803 = vmatpush1.bf16.msra.mxu0 0
    %804 = vmatprep.subr.bf16.mxu0 0
    %805 = vmatpush1.bf16.msra.mxu0 %v788
    %806 = vmatprep.subr.bf16.mxu0 0
    %807 = vmatpush2.bf16.msra.mxu0 0
    %808 = vmatprep.subr.bf16.mxu0 0
    %809 = vmatpush2.bf16.msra.mxu0 0
    %810 = vmatprep.subr.bf16.mxu0 0
    %811 = vmatpush2.bf16.msra.mxu0 0
    %812 = vmatprep.subr.bf16.mxu0 0
    %813 = vmatpush2.bf16.msra.mxu0 0
    %814 = vmatprep.subr.bf16.mxu0 0
    %815 = vmatpush2.bf16.msra.mxu0 0
    %816 = vmatprep.subr.bf16.mxu0 0
    %817 = vmatpush2.bf16.msra.mxu0 0
    %818 = vmatprep.subr.bf16.mxu0 0
    %819 = vmatpush2.bf16.msra.mxu0 0
    %820 = vmatprep.subr.bf16.mxu0 0
    %821 = vmatpush2.bf16.msra.mxu0 0
    %822 = vmatprep.mubr.bf16.mxu0 0
    %823 = vmatmul.mubr.bf16.gmra.mxu0 %v493
    %v824 = vpop.f32.mrf.mxu0
    %v825 = vadd.f32 0.0, %v824
    %v826 = vpop.f32.mrf.mxu0
    %v827 = vpop.f32.mrf.mxu0
    %v828 = vpop.f32.mrf.mxu0
    %829 = vdwg.mxu0
    %s830 = scalar_lea.vmem [#allocation10], 16
    %v831 = vld [vmem:[%s830] sm:$0xf]
    %v832 = vld [vmem:[%s830 + $0x4] sm:$0xf]
    %v833 = vld [vmem:[%s830 + $0x8] sm:$0xf]
    %v834 = vld [vmem:[%s830 + $0xc] sm:$0xf]
    %s835 = scalar_lea.vmem [#allocation12], 1
    %v836 = vld [vmem:[%s835] sm:$0x1]
    %v838 = vlaneseq
    %v839 = vshrl.u32 %v838, 7
    %v840 = vsub.s32 0, %v839
    %v841 = vrot.slane %v836, %v840
    %v847 = vunpack.c.l.b16 %v831
    %v848 = vunpack.c.l.b16 %v832
    %v849 = vunpack.c.l.b16 %v833
    %v850 = vunpack.c.l.b16 %v834
    %v851 = vpack.c.b16 %v848, %v847
    %v852 = vpack.c.b16 %v850, %v849
    %855 = vmatprep.subr.bf16.mxu0 0
    %856 = vmatpush1.bf16.msra.mxu0 0
    %857 = vmatprep.subr.bf16.mxu0 0
    %858 = vmatpush1.bf16.msra.mxu0 0
    %859 = vmatprep.subr.bf16.mxu0 0
    %860 = vmatpush1.bf16.msra.mxu0 0
    %861 = vmatprep.subr.bf16.mxu0 0
    %862 = vmatpush1.bf16.msra.mxu0 0
    %863 = vmatprep.subr.bf16.mxu0 0
    %864 = vmatpush1.bf16.msra.mxu0 0
    %865 = vmatprep.subr.bf16.mxu0 0
    %866 = vmatpush1.bf16.msra.mxu0 0
    %867 = vmatprep.subr.bf16.mxu0 0
    %868 = vmatpush1.bf16.msra.mxu0 %v852
    %869 = vmatprep.subr.bf16.mxu0 0
    %870 = vmatpush1.bf16.msra.mxu0 %v851
    %871 = vmatprep.subr.bf16.mxu0 0
    %872 = vmatpush2.bf16.msra.mxu0 0
    %873 = vmatprep.subr.bf16.mxu0 0
    %874 = vmatpush2.bf16.msra.mxu0 0
    %875 = vmatprep.subr.bf16.mxu0 0
    %876 = vmatpush2.bf16.msra.mxu0 0
    %877 = vmatprep.subr.bf16.mxu0 0
    %878 = vmatpush2.bf16.msra.mxu0 0
    %879 = vmatprep.subr.bf16.mxu0 0
    %880 = vmatpush2.bf16.msra.mxu0 0
    %881 = vmatprep.subr.bf16.mxu0 0
    %882 = vmatpush2.bf16.msra.mxu0 0
    %883 = vmatprep.subr.bf16.mxu0 0
    %884 = vmatpush2.bf16.msra.mxu0 0
    %885 = vmatprep.subr.bf16.mxu0 0
    %886 = vmatpush2.bf16.msra.mxu0 0
    %887 = vmatprep.mubr.bf16.mxu0 0
    %888 = vmatmul.mubr.bf16.gmra.mxu0 %v625
    %v889 = vpop.f32.mrf.mxu0
    %v890 = vadd.f32 %v841, %v889
    %v891 = vpop.f32.mrf.mxu0
    %v892 = vpop.f32.mrf.mxu0
    %v893 = vpop.f32.mrf.mxu0
    %894 = vdwg.mxu0
    %v895 = vadd.f32 %v890, %v825
    %vm896 = vcmp.ge.f32.partialorder %v895, 0.0
    %v897 = vmul.f32 %v895, 0.01
    %v898 = vsel %vm896, %v895, %v897
    %vm899 = vcmp.ge.f32.partialorder %v898, 0.0
    %v900 = vmul.f32 %v898, 0.01
    %v901 = vsel %vm899, %v898, %v900
    %v902 = vld [vmem:[#allocation6] sm:$0xff]
    %v903 = vadd.f32 %v901, %v902
    %v904 = vpack.c.bf16 %v903, %v903
    %v905 = vld [vmem:[%s11] sm:$0xf]
    %v906 = vld [vmem:[%s11 + $0x4] sm:$0xf]
    %v907 = vld [vmem:[%s11 + $0x8] sm:$0xf]
    %v908 = vld [vmem:[%s11 + $0xc] sm:$0xf]
    %v909 = vld [vmem:[#allocation13] sm:$0x1]
    %v911 = vlaneseq
    %v912 = vshrl.u32 %v911, 7
    %v913 = vsub.s32 0, %v912
    %v914 = vrot.slane %v909, %v913
    %v920 = vunpack.c.l.b16 %v905
    %v921 = vunpack.c.l.b16 %v906
    %v922 = vunpack.c.l.b16 %v907
    %v923 = vunpack.c.l.b16 %v908
    %v924 = vpack.c.b16 %v921, %v920
    %v925 = vpack.c.b16 %v923, %v922
    %v929 = vsel %vm289, %v904, 0
    %931 = vmatprep.subr.bf16.mxu0 0
    %932 = vmatpush1.bf16.msra.mxu0 0
    %933 = vmatprep.subr.bf16.mxu0 0
    %934 = vmatpush1.bf16.msra.mxu0 0
    %935 = vmatprep.subr.bf16.mxu0 0
    %936 = vmatpush1.bf16.msra.mxu0 0
    %937 = vmatprep.subr.bf16.mxu0 0
    %938 = vmatpush1.bf16.msra.mxu0 0
    %939 = vmatprep.subr.bf16.mxu0 0
    %940 = vmatpush1.bf16.msra.mxu0 0
    %941 = vmatprep.subr.bf16.mxu0 0
    %942 = vmatpush1.bf16.msra.mxu0 0
    %943 = vmatprep.subr.bf16.mxu0 0
    %944 = vmatpush1.bf16.msra.mxu0 %v925
    %945 = vmatprep.subr.bf16.mxu0 0
    %946 = vmatpush1.bf16.msra.mxu0 %v924
    %947 = vmatprep.subr.bf16.mxu0 0
    %948 = vmatpush2.bf16.msra.mxu0 0
    %949 = vmatprep.subr.bf16.mxu0 0
    %950 = vmatpush2.bf16.msra.mxu0 0
    %951 = vmatprep.subr.bf16.mxu0 0
    %952 = vmatpush2.bf16.msra.mxu0 0
    %953 = vmatprep.subr.bf16.mxu0 0
    %954 = vmatpush2.bf16.msra.mxu0 0
    %955 = vmatprep.subr.bf16.mxu0 0
    %956 = vmatpush2.bf16.msra.mxu0 0
    %957 = vmatprep.subr.bf16.mxu0 0
    %958 = vmatpush2.bf16.msra.mxu0 0
    %959 = vmatprep.subr.bf16.mxu0 0
    %960 = vmatpush2.bf16.msra.mxu0 0
    %961 = vmatprep.subr.bf16.mxu0 0
    %962 = vmatpush2.bf16.msra.mxu0 0
    %963 = vmatprep.mubr.bf16.mxu0 0
    %964 = vmatmul.mubr.bf16.gmra.mxu0 %v929
    %v965 = vpop.f32.mrf.mxu0
    %v966 = vadd.f32 %v914, %v965
    %v967 = vpop.f32.mrf.mxu0
    %v968 = vpop.f32.mrf.mxu0
    %v969 = vpop.f32.mrf.mxu0
    %970 = vdwg.mxu0
    %vm971 = vcmask 802560
    %v972 = vsel %vm971, %v966, -inf
    %v973 = vrot.slane %v972, 4
    %v974 = vmax.f32 %v972, %v973
    %v975 = vrot.slane %v974, 2
    %v976 = vmax.f32 %v974, %v975
    %v977 = vrot.slane %v976, 1
    %v978 = vmax.f32 %v976, %v977
    %v979 = vsub.f32 %v966, %v978
    %v980 = vmul.f32 %v979, 1.442695
    %v981 = vpow.pop %v980
    %v982 = vsel %vm971, %v981, 0.0
    %v983 = vrot.slane %v982, 4
    %v984 = vadd.f32 %v982, %v983
    %v985 = vrot.slane %v984, 2
    %v986 = vadd.f32 %v984, %v985
    %v987 = vrot.slane %v986, 1
    %v988 = vadd.f32 %v986, %v987
    %v989 = vrcp.pop %v988
    %v990 = vmul.f32 %v981, %v989
    %992 = vrot.lane.b32.xlu0 %v990, 31
    %v993 = vpop.permute.xlu0 %992
    %995 = vxpose.xlu0.b32.start [1/16] %v993, 128
    %996 = vxpose.xlu0.b32.cont [2/16] 0.0, 128
    %997 = vxpose.xlu0.b32.cont [3/16] 0.0, 128
    %998 = vxpose.xlu0.b32.cont [4/16] 0.0, 128
    %999 = vxpose.xlu0.b32.cont [5/16] 0.0, 128
    %1000 = vxpose.xlu0.b32.cont [6/16] 0.0, 128
    %1001 = vxpose.xlu0.b32.cont [7/16] 0.0, 128
    %1002 = vxpose.xlu0.b32.cont [8/16] 0.0, 128
    %1003 = vxpose.xlu0.b32.cont [9/16] 0.0, 128
    %1004 = vxpose.xlu0.b32.cont [10/16] 0.0, 128
    %1005 = vxpose.xlu0.b32.cont [11/16] 0.0, 128
    %1006 = vxpose.xlu0.b32.cont [12/16] 0.0, 128
    %1007 = vxpose.xlu0.b32.cont [13/16] 0.0, 128
    %1008 = vxpose.xlu0.b32.cont [14/16] 0.0, 128
    %1009 = vxpose.xlu0.b32.cont [15/16] 0.0, 128
    %1010 = vxpose.xlu0.b32.end [16/16] 0.0, 128
    %v1011 = vpop.trf.xlu0
    %v1012 = vpop.trf.xlu0
    %v1013 = vpop.trf.xlu0
    %v1014 = vpop.trf.xlu0
    %v1015 = vpop.trf.xlu0
    %v1016 = vpop.trf.xlu0
    %v1017 = vpop.trf.xlu0
    %v1018 = vpop.trf.xlu0
    %v1019 = vpop.trf.xlu0
    %v1020 = vpop.trf.xlu0
    %v1021 = vpop.trf.xlu0
    %v1022 = vpop.trf.xlu0
    %v1023 = vpop.trf.xlu0
    %v1024 = vpop.trf.xlu0
    %v1025 = vpop.trf.xlu0
    %v1026 = vpop.trf.xlu0
    %v1028 = vsel %vm404, %v1011, 0
    %1030 = vmatprep.subr.mxu0 0.0
    %1031 = vmatpush1.msra.mxu0 0.0
    %1032 = vmatprep.subr.mxu0 0.0
    %1033 = vmatpush1.msra.mxu0 0.0
    %1034 = vmatprep.subr.mxu0 0.0
    %1035 = vmatpush1.msra.mxu0 0.0
    %1036 = vmatprep.subr.mxu0 0.0
    %1037 = vmatpush1.msra.mxu0 0.0
    %1038 = vmatprep.subr.mxu0 0.0
    %1039 = vmatpush1.msra.mxu0 0.0
    %1040 = vmatprep.subr.mxu0 0.0
    %1041 = vmatpush1.msra.mxu0 0.0
    %1042 = vmatprep.subr.mxu0 0.0
    %1043 = vmatpush1.msra.mxu0 0.0
    %1044 = vmatprep.subr.mxu0 0.0
    %1045 = vmatpush1.msra.mxu0 0.0
    %1046 = vmatprep.subr.mxu0 0.0
    %1047 = vmatpush1.msra.mxu0 0.0
    %1048 = vmatprep.subr.mxu0 0.0
    %1049 = vmatpush1.msra.mxu0 0.0
    %1050 = vmatprep.subr.mxu0 0.0
    %1051 = vmatpush1.msra.mxu0 0.0
    %1052 = vmatprep.subr.mxu0 0.0
    %1053 = vmatpush1.msra.mxu0 0.0
    %1054 = vmatprep.subr.mxu0 0.0
    %1055 = vmatpush1.msra.mxu0 0.0
    %1056 = vmatprep.subr.mxu0 0.0
    %1057 = vmatpush1.msra.mxu0 0.0
    %1058 = vmatprep.subr.mxu0 0.0
    %1059 = vmatpush1.msra.mxu0 0.0
    %1060 = vmatprep.subr.mxu0 0.0
    %1061 = vmatpush1.msra.mxu0 %v903
    %1062 = vmatprep.subr.mxu0 0.0
    %1063 = vmatpush2.msra.mxu0 0.0
    %1064 = vmatprep.subr.mxu0 0.0
    %1065 = vmatpush2.msra.mxu0 0.0
    %1066 = vmatprep.subr.mxu0 0.0
    %1067 = vmatpush2.msra.mxu0 0.0
    %1068 = vmatprep.subr.mxu0 0.0
    %1069 = vmatpush2.msra.mxu0 0.0
    %1070 = vmatprep.subr.mxu0 0.0
    %1071 = vmatpush2.msra.mxu0 0.0
    %1072 = vmatprep.subr.mxu0 0.0
    %1073 = vmatpush2.msra.mxu0 0.0
    %1074 = vmatprep.subr.mxu0 0.0
    %1075 = vmatpush2.msra.mxu0 0.0
    %1076 = vmatprep.subr.mxu0 0.0
    %1077 = vmatpush2.msra.mxu0 0.0
    %1078 = vmatprep.subr.mxu0 0.0
    %1079 = vmatpush2.msra.mxu0 0.0
    %1080 = vmatprep.subr.mxu0 0.0
    %1081 = vmatpush2.msra.mxu0 0.0
    %1082 = vmatprep.subr.mxu0 0.0
    %1083 = vmatpush2.msra.mxu0 0.0
    %1084 = vmatprep.subr.mxu0 0.0
    %1085 = vmatpush2.msra.mxu0 0.0
    %1086 = vmatprep.subr.mxu0 0.0
    %1087 = vmatpush2.msra.mxu0 0.0
    %1088 = vmatprep.subr.mxu0 0.0
    %1089 = vmatpush2.msra.mxu0 0.0
    %1090 = vmatprep.subr.mxu0 0.0
    %1091 = vmatpush2.msra.mxu0 0.0
    %1092 = vmatprep.subr.mxu0 0.0
    %1093 = vmatpush2.msra.mxu0 0.0
    %1094 = vmatprep.mubr.f32.mxu0 0.0
    %1095 = vmatmul.mubr.f32.gmra.mxu0 %v1028
    %v1096 = vpop.f32.mrf.mxu0
    %v1097 = vadd.f32 0.0, %v1096
    %v1098 = vpop.f32.mrf.mxu0
    %1099 = vdwg.mxu0
    %v1100 = vpack.c.bf16 %v1097, %v1097
    %v1101 = vld [vmem:[%s13] sm:$0xf]
    %v1102 = vld [vmem:[%s13 + $0x4] sm:$0xf]
    %v1103 = vld [vmem:[%s13 + $0x8] sm:$0xf]
    %v1104 = vld [vmem:[%s13 + $0xc] sm:$0xf]
    %v1105 = vld [vmem:[#allocation15] sm:$0x1]
    %v1110 = vunpack.c.l.b16 %v1101
    %v1111 = vunpack.c.l.b16 %v1102
    %v1112 = vunpack.c.l.b16 %v1103
    %v1113 = vunpack.c.l.b16 %v1104
    %v1114 = vpack.c.b16 %v1111, %v1110
    %v1115 = vpack.c.b16 %v1113, %v1112
    %v1119 = vsel %vm289, %v1100, 0
    %1121 = vmatprep.subr.bf16.mxu0 0
    %1122 = vmatpush1.bf16.msra.mxu0 0
    %1123 = vmatprep.subr.bf16.mxu0 0
    %1124 = vmatpush1.bf16.msra.mxu0 0
    %1125 = vmatprep.subr.bf16.mxu0 0
    %1126 = vmatpush1.bf16.msra.mxu0 0
    %1127 = vmatprep.subr.bf16.mxu0 0
    %1128 = vmatpush1.bf16.msra.mxu0 0
    %1129 = vmatprep.subr.bf16.mxu0 0
    %1130 = vmatpush1.bf16.msra.mxu0 0
    %1131 = vmatprep.subr.bf16.mxu0 0
    %1132 = vmatpush1.bf16.msra.mxu0 0
    %1133 = vmatprep.subr.bf16.mxu0 0
    %1134 = vmatpush1.bf16.msra.mxu0 %v1115
    %1135 = vmatprep.subr.bf16.mxu0 0
    %1136 = vmatpush1.bf16.msra.mxu0 %v1114
    %1137 = vmatprep.subr.bf16.mxu0 0
    %1138 = vmatpush2.bf16.msra.mxu0 0
    %1139 = vmatprep.subr.bf16.mxu0 0
    %1140 = vmatpush2.bf16.msra.mxu0 0
    %1141 = vmatprep.subr.bf16.mxu0 0
    %1142 = vmatpush2.bf16.msra.mxu0 0
    %1143 = vmatprep.subr.bf16.mxu0 0
    %1144 = vmatpush2.bf16.msra.mxu0 0
    %1145 = vmatprep.subr.bf16.mxu0 0
    %1146 = vmatpush2.bf16.msra.mxu0 0
    %1147 = vmatprep.subr.bf16.mxu0 0
    %1148 = vmatpush2.bf16.msra.mxu0 0
    %1149 = vmatprep.subr.bf16.mxu0 0
    %1150 = vmatpush2.bf16.msra.mxu0 0
    %1151 = vmatprep.subr.bf16.mxu0 0
    %1152 = vmatpush2.bf16.msra.mxu0 0
    %1153 = vmatprep.mubr.bf16.mxu0 0
    %1154 = vmatmul.mubr.bf16.gmra.mxu0 %v1119
    %v1155 = vpop.f32.mrf.mxu0
    %v1156 = vadd.f32 %v1105, %v1155
    %v1157 = vpop.f32.mrf.mxu0
    %v1158 = vpop.f32.mrf.mxu0
    %v1159 = vpop.f32.mrf.mxu0
    %1160 = vdwg.mxu0
    %v1161 = vlaneseq
    %v1162 = vshrl.u32 %v1161, 7
    %v1163 = vsub.s32 0, %v1162
    %v1164 = vrot.slane %v1156, %v1163
    %v1165 = vmul.f32 %v966, %v1164
    %v1166 = vpack.c.bf16 %v1165, %v1165
    %v1171 = vunpack.c.l.b16 %v268
    %v1172 = vunpack.c.l.b16 %v269
    %v1173 = vunpack.c.l.b16 %v270
    %v1174 = vunpack.c.l.b16 %v271
    %v1175 = vpack.c.b16 %v1172, %v1171
    %v1176 = vpack.c.b16 %v1174, %v1173
    %v1180 = vsel %vm289, %v1166, 0
    %1182 = vmatprep.subr.bf16.mxu0 0
    %1183 = vmatpush1.bf16.msra.mxu0 0
    %1184 = vmatprep.subr.bf16.mxu0 0
    %1185 = vmatpush1.bf16.msra.mxu0 0
    %1186 = vmatprep.subr.bf16.mxu0 0
    %1187 = vmatpush1.bf16.msra.mxu0 0
    %1188 = vmatprep.subr.bf16.mxu0 0
    %1189 = vmatpush1.bf16.msra.mxu0 0
    %1190 = vmatprep.subr.bf16.mxu0 0
    %1191 = vmatpush1.bf16.msra.mxu0 0
    %1192 = vmatprep.subr.bf16.mxu0 0
    %1193 = vmatpush1.bf16.msra.mxu0 0
    %1194 = vmatprep.subr.bf16.mxu0 0
    %1195 = vmatpush1.bf16.msra.mxu0 %v1176
    %1196 = vmatprep.subr.bf16.mxu0 0
    %1197 = vmatpush1.bf16.msra.mxu0 %v1175
    %1198 = vmatprep.subr.bf16.mxu0 0
    %1199 = vmatpush2.bf16.msra.mxu0 0
    %1200 = vmatprep.subr.bf16.mxu0 0
    %1201 = vmatpush2.bf16.msra.mxu0 0
    %1202 = vmatprep.subr.bf16.mxu0 0
    %1203 = vmatpush2.bf16.msra.mxu0 0
    %1204 = vmatprep.subr.bf16.mxu0 0
    %1205 = vmatpush2.bf16.msra.mxu0 0
    %1206 = vmatprep.subr.bf16.mxu0 0
    %1207 = vmatpush2.bf16.msra.mxu0 0
    %1208 = vmatprep.subr.bf16.mxu0 0
    %1209 = vmatpush2.bf16.msra.mxu0 0
    %1210 = vmatprep.subr.bf16.mxu0 0
    %1211 = vmatpush2.bf16.msra.mxu0 0
    %1212 = vmatprep.subr.bf16.mxu0 0
    %1213 = vmatpush2.bf16.msra.mxu0 0
    %1214 = vmatprep.mubr.bf16.mxu0 0
    %1215 = vmatmul.mubr.bf16.gmra.mxu0 %v1180
    %v1216 = vpop.f32.mrf.mxu0
    %v1217 = vadd.f32 0.0, %v1216
    %v1218 = vpop.f32.mrf.mxu0
    %v1219 = vpop.f32.mrf.mxu0
    %v1220 = vpop.f32.mrf.mxu0
    %1221 = vdwg.mxu0
    %v1222 = vmul.f32 %v1217, 0.5
    %v1223 = vsel %vm404, %v1222, -inf
    %v1224 = vrot.slane %v1223, 4
    %v1225 = vmax.f32 %v1223, %v1224
    %v1226 = vrot.slane %v1225, 2
    %v1227 = vmax.f32 %v1225, %v1226
    %v1228 = vrot.slane %v1227, 1
    %v1229 = vmax.f32 %v1227, %v1228
    %v1230 = vsub.f32 %v1222, %v1229
    %v1231 = vmul.f32 %v1230, 1.442695
    %v1232 = vpow.pop %v1231
    %v1233 = vsel %vm404, %v1232, 0.0
    %v1234 = vrot.slane %v1233, 4
    %v1235 = vadd.f32 %v1233, %v1234
    %v1236 = vrot.slane %v1235, 2
    %v1237 = vadd.f32 %v1235, %v1236
    %v1238 = vrot.slane %v1237, 1
    %v1239 = vadd.f32 %v1237, %v1238
    %v1240 = vrcp.pop %v1239
    %v1241 = vmul.f32 %v1232, %v1240
    %v1242 = vpack.c.bf16 %v1241, %v1241
    %v1244 = vsel %vm404, %v1242, 0
    %v1247 = vsel %vm404, %v1175, 0
    %v1250 = vsel %vm404, %v1176, 0
    %1252 = vmatprep.subr.bf16.mxu0 0
    %1253 = vmatpush1.bf16.xpose.msra.mxu0 0
    %1254 = vmatprep.subr.bf16.mxu0 0
    %1255 = vmatpush1.bf16.xpose.msra.mxu0 0
    %1256 = vmatprep.subr.bf16.mxu0 0
    %1257 = vmatpush1.bf16.xpose.msra.mxu0 0
    %1258 = vmatprep.subr.bf16.mxu0 0
    %1259 = vmatpush1.bf16.xpose.msra.mxu0 0
    %1260 = vmatprep.subr.bf16.mxu0 0
    %1261 = vmatpush1.bf16.xpose.msra.mxu0 0
    %1262 = vmatprep.subr.bf16.mxu0 0
    %1263 = vmatpush1.bf16.xpose.msra.mxu0 0
    %1264 = vmatprep.subr.bf16.mxu0 0
    %1265 = vmatpush1.bf16.xpose.msra.mxu0 %v1250
    %1266 = vmatprep.subr.bf16.mxu0 0
    %1267 = vmatpush1.bf16.xpose.msra.mxu0 %v1247
    %1268 = vmatprep.subr.bf16.mxu0 0
    %1269 = vmatpush2.bf16.xpose.msra.mxu0 0
    %1270 = vmatprep.subr.bf16.mxu0 0
    %1271 = vmatpush2.bf16.xpose.msra.mxu0 0
    %1272 = vmatprep.subr.bf16.mxu0 0
    %1273 = vmatpush2.bf16.xpose.msra.mxu0 0
    %1274 = vmatprep.subr.bf16.mxu0 0
    %1275 = vmatpush2.bf16.xpose.msra.mxu0 0
    %1276 = vmatprep.subr.bf16.mxu0 0
    %1277 = vmatpush2.bf16.xpose.msra.mxu0 0
    %1278 = vmatprep.subr.bf16.mxu0 0
    %1279 = vmatpush2.bf16.xpose.msra.mxu0 0
    %1280 = vmatprep.subr.bf16.mxu0 0
    %1281 = vmatpush2.bf16.xpose.msra.mxu0 0
    %1282 = vmatprep.subr.bf16.mxu0 0
    %1283 = vmatpush2.bf16.xpose.msra.mxu0 0
    %1284 = vmatprep.mubr.bf16.mxu0 0
    %1285 = vmatmul.mubr.bf16.gmra.mxu0 %v1244
    %v1286 = vpop.f32.mrf.mxu0
    %v1287 = vadd.f32 0.0, %v1286
    %v1288 = vpop.f32.mrf.mxu0
    %v1289 = vpop.f32.mrf.mxu0
    %v1290 = vpop.f32.mrf.mxu0
    %1291 = vdwg.mxu0
    %1293 = vrot.lane.b32.xlu0 %v966, 96
    %v1294 = vpop.permute.xlu0 %1293
    %v1296 = vmul.f32 %v1287, %v1294
    %v1297 = vsel %vm289, %v1296, 0.0
    %v1298 = vrot.slane %v1297, 4
    %v1299 = vadd.f32 %v1297, %v1298
    %v1300 = vrot.slane %v1299, 2
    %v1301 = vadd.f32 %v1299, %v1300
    %v1302 = vrot.slane %v1301, 1
    %v1303 = vadd.f32 %v1301, %v1302
    %v1304 = vpack.c.bf16 %v1303, %v1303
    %v1305 = vld [vmem:[#allocation16] sm:$0xf]
    %v1306 = vld [vmem:[#allocation16 + $0x4] sm:$0xf]
    %v1307 = vld [vmem:[#allocation16 + $0x8] sm:$0xf]
    %v1308 = vld [vmem:[#allocation16 + $0xc] sm:$0xf]
    %v1309 = vld [vmem:[#allocation18] sm:$0x1]
    %v1314 = vunpack.c.l.b16 %v1305
    %v1315 = vunpack.c.l.b16 %v1306
    %v1316 = vunpack.c.l.b16 %v1307
    %v1317 = vunpack.c.l.b16 %v1308
    %v1318 = vpack.c.b16 %v1315, %v1314
    %v1319 = vpack.c.b16 %v1317, %v1316
    %v1323 = vsel %vm289, %v1304, 0
    %1325 = vmatprep.subr.bf16.mxu0 0
    %1326 = vmatpush1.bf16.msra.mxu0 0
    %1327 = vmatprep.subr.bf16.mxu0 0
    %1328 = vmatpush1.bf16.msra.mxu0 0
    %1329 = vmatprep.subr.bf16.mxu0 0
    %1330 = vmatpush1.bf16.msra.mxu0 0
    %1331 = vmatprep.subr.bf16.mxu0 0
    %1332 = vmatpush1.bf16.msra.mxu0 0
    %1333 = vmatprep.subr.bf16.mxu0 0
    %1334 = vmatpush1.bf16.msra.mxu0 0
    %1335 = vmatprep.subr.bf16.mxu0 0
    %1336 = vmatpush1.bf16.msra.mxu0 0
    %1337 = vmatprep.subr.bf16.mxu0 0
    %1338 = vmatpush1.bf16.msra.mxu0 %v1319
    %1339 = vmatprep.subr.bf16.mxu0 0
    %1340 = vmatpush1.bf16.msra.mxu0 %v1318
    %1341 = vmatprep.subr.bf16.mxu0 0
    %1342 = vmatpush2.bf16.msra.mxu0 0
    %1343 = vmatprep.subr.bf16.mxu0 0
    %1344 = vmatpush2.bf16.msra.mxu0 0
    %1345 = vmatprep.subr.bf16.mxu0 0
    %1346 = vmatpush2.bf16.msra.mxu0 0
    %1347 = vmatprep.subr.bf16.mxu0 0
    %1348 = vmatpush2.bf16.msra.mxu0 0
    %1349 = vmatprep.subr.bf16.mxu0 0
    %1350 = vmatpush2.bf16.msra.mxu0 0
    %1351 = vmatprep.subr.bf16.mxu0 0
    %1352 = vmatpush2.bf16.msra.mxu0 0
    %1353 = vmatprep.subr.bf16.mxu0 0
    %1354 = vmatpush2.bf16.msra.mxu0 0
    %1355 = vmatprep.subr.bf16.mxu0 0
    %1356 = vmatpush2.bf16.msra.mxu0 0
    %1357 = vmatprep.mubr.bf16.mxu0 0
    %1358 = vmatmul.mubr.bf16.gmra.mxu0 %v1323
    %v1359 = vpop.f32.mrf.mxu0
    %v1360 = vadd.f32 %v1309, %v1359
    %v1361 = vpop.f32.mrf.mxu0
    %v1362 = vpop.f32.mrf.mxu0
    %v1363 = vpop.f32.mrf.mxu0
    %1364 = vdwg.mxu0
    %vm1365 = vcmask 253952
    %v1366 = vsel %vm1365, %v1360, 0.0
    %1367 = vadd.xlane.f32.xlu0 %v1366
    %v1368 = vpop.xlane.xlu0 %1367
    %v1369 = vrcp.pop 32.0
    %v1370 = vmul.f32 %v1368, %v1369
    %v1371 = vsub.f32 %v1360, %v1370
    %v1372 = vmul.f32 %v1371, %v1371
    %v1373 = vsel %vm1365, %v1372, 0.0
    %1374 = vadd.xlane.f32.xlu0 %v1373
    %v1375 = vpop.xlane.xlu0 %1374
    %v1376 = vmul.f32 %v1375, %v1369
    %v1377 = vadd.f32 %v1376, 1e-05
    %v1378 = vrsqrt.pop %v1377
    %v1379 = vmul.f32 %v1371, %v1378
    %v1380 = vld [vmem:[#allocation19] sm:$0x1]
    %v1381 = vmul.f32 %v1379, %v1380
    %v1382 = vld [vmem:[#allocation21] sm:$0x1]
    %v1383 = vadd.f32 %v1381, %v1382
    %v1384 = vpack.c.bf16 %v1383, %v1383
    %v1385 = vld [vmem:[#allocation22] sm:$0xf]
    %v1386 = vld [vmem:[#allocation22 + $0x4] sm:$0xf]
    %v1387 = vld [vmem:[#allocation22 + $0x8] sm:$0xf]
    %v1388 = vld [vmem:[#allocation22 + $0xc] sm:$0xf]
    %v1389 = vld [vmem:[#allocation24] sm:$0x1]
    %v1394 = vunpack.c.l.b16 %v1385
    %v1395 = vunpack.c.l.b16 %v1386
    %v1396 = vunpack.c.l.b16 %v1387
    %v1397 = vunpack.c.l.b16 %v1388
    %v1398 = vpack.c.b16 %v1395, %v1394
    %v1399 = vpack.c.b16 %v1397, %v1396
    %v1403 = vsel %vm289, %v1384, 0
    %1405 = vmatprep.subr.bf16.mxu0 0
    %1406 = vmatpush1.bf16.msra.mxu0 0
    %1407 = vmatprep.subr.bf16.mxu0 0
    %1408 = vmatpush1.bf16.msra.mxu0 0
    %1409 = vmatprep.subr.bf16.mxu0 0
    %1410 = vmatpush1.bf16.msra.mxu0 0
    %1411 = vmatprep.subr.bf16.mxu0 0
    %1412 = vmatpush1.bf16.msra.mxu0 0
    %1413 = vmatprep.subr.bf16.mxu0 0
    %1414 = vmatpush1.bf16.msra.mxu0 0
    %1415 = vmatprep.subr.bf16.mxu0 0
    %1416 = vmatpush1.bf16.msra.mxu0 0
    %1417 = vmatprep.subr.bf16.mxu0 0
    %1418 = vmatpush1.bf16.msra.mxu0 %v1399
    %1419 = vmatprep.subr.bf16.mxu0 0
    %1420 = vmatpush1.bf16.msra.mxu0 %v1398
    %1421 = vmatprep.subr.bf16.mxu0 0
    %1422 = vmatpush2.bf16.msra.mxu0 0
    %1423 = vmatprep.subr.bf16.mxu0 0
    %1424 = vmatpush2.bf16.msra.mxu0 0
    %1425 = vmatprep.subr.bf16.mxu0 0
    %1426 = vmatpush2.bf16.msra.mxu0 0
    %1427 = vmatprep.subr.bf16.mxu0 0
    %1428 = vmatpush2.bf16.msra.mxu0 0
    %1429 = vmatprep.subr.bf16.mxu0 0
    %1430 = vmatpush2.bf16.msra.mxu0 0
    %1431 = vmatprep.subr.bf16.mxu0 0
    %1432 = vmatpush2.bf16.msra.mxu0 0
    %1433 = vmatprep.subr.bf16.mxu0 0
    %1434 = vmatpush2.bf16.msra.mxu0 0
    %1435 = vmatprep.subr.bf16.mxu0 0
    %1436 = vmatpush2.bf16.msra.mxu0 0
    %1437 = vmatprep.mubr.bf16.mxu0 0
    %1438 = vmatmul.mubr.bf16.gmra.mxu0 %v1403
    %v1439 = vpop.f32.mrf.mxu0
    %v1440 = vadd.f32 %v1389, %v1439
    %v1441 = vpop.f32.mrf.mxu0
    %v1442 = vpop.f32.mrf.mxu0
    %v1443 = vpop.f32.mrf.mxu0
    %1444 = vdwg.mxu0
    %v1445 = vpack.c.bf16 %v1440, %v1440
    %v1446 = vld [vmem:[%s21] sm:$0xf]
    %v1447 = vld [vmem:[%s21 + $0x4] sm:$0xf]
    %v1448 = vld [vmem:[%s21 + $0x8] sm:$0xf]
    %v1449 = vld [vmem:[%s21 + $0xc] sm:$0xf]
    %v1450 = vld [vmem:[%s22] sm:$0x1]
    %v1455 = vunpack.c.l.b16 %v1446
    %v1456 = vunpack.c.l.b16 %v1447
    %v1457 = vunpack.c.l.b16 %v1448
    %v1458 = vunpack.c.l.b16 %v1449
    %v1459 = vpack.c.b16 %v1456, %v1455
    %v1460 = vpack.c.b16 %v1458, %v1457
    %v1464 = vsel %vm289, %v1445, 0
    %1466 = vmatprep.subr.bf16.mxu0 0
    %1467 = vmatpush1.bf16.msra.mxu0 0
    %1468 = vmatprep.subr.bf16.mxu0 0
    %1469 = vmatpush1.bf16.msra.mxu0 0
    %1470 = vmatprep.subr.bf16.mxu0 0
    %1471 = vmatpush1.bf16.msra.mxu0 0
    %1472 = vmatprep.subr.bf16.mxu0 0
    %1473 = vmatpush1.bf16.msra.mxu0 0
    %1474 = vmatprep.subr.bf16.mxu0 0
    %1475 = vmatpush1.bf16.msra.mxu0 0
    %1476 = vmatprep.subr.bf16.mxu0 0
    %1477 = vmatpush1.bf16.msra.mxu0 0
    %1478 = vmatprep.subr.bf16.mxu0 0
    %1479 = vmatpush1.bf16.msra.mxu0 %v1460
    %1480 = vmatprep.subr.bf16.mxu0 0
    %1481 = vmatpush1.bf16.msra.mxu0 %v1459
    %1482 = vmatprep.subr.bf16.mxu0 0
    %1483 = vmatpush2.bf16.msra.mxu0 0
    %1484 = vmatprep.subr.bf16.mxu0 0
    %1485 = vmatpush2.bf16.msra.mxu0 0
    %1486 = vmatprep.subr.bf16.mxu0 0
    %1487 = vmatpush2.bf16.msra.mxu0 0
    %1488 = vmatprep.subr.bf16.mxu0 0
    %1489 = vmatpush2.bf16.msra.mxu0 0
    %1490 = vmatprep.subr.bf16.mxu0 0
    %1491 = vmatpush2.bf16.msra.mxu0 0
    %1492 = vmatprep.subr.bf16.mxu0 0
    %1493 = vmatpush2.bf16.msra.mxu0 0
    %1494 = vmatprep.subr.bf16.mxu0 0
    %1495 = vmatpush2.bf16.msra.mxu0 0
    %1496 = vmatprep.subr.bf16.mxu0 0
    %1497 = vmatpush2.bf16.msra.mxu0 0
    %1498 = vmatprep.mubr.bf16.mxu0 0
    %1499 = vmatmul.mubr.bf16.gmra.mxu0 %v1464
    %v1500 = vpop.f32.mrf.mxu0
    %v1501 = vadd.f32 %v1450, %v1500
    %v1502 = vpop.f32.mrf.mxu0
    %v1503 = vpop.f32.mrf.mxu0
    %v1504 = vpop.f32.mrf.mxu0
    %1505 = vdwg.mxu0
    %v1506 = vlaneseq
    %v1507 = vshrl.u32 %v1506, 7
    %v1508 = vsub.s32 0, %v1507
    %v1509 = vrot.slane %v1501, %v1508
    %1511 = vrot.lane.b32.xlu0 %v1509, 64
    %v1512 = vpop.permute.xlu0 %1511
    %v1514 = vmul.f32 %v966, %v1512
    %v1515 = vpack.c.bf16 %v1514, %v1514
    %1517 = vrot.lane.b32.xlu0 %v1515, 64
    %v1518 = vpop.permute.xlu0 %1517
    %v1520 = vsel %vm289, %v1518, 0
    %1522 = vmatprep.subr.bf16.mxu0 0
    %1523 = vmatpush1.bf16.msra.mxu0 0
    %1524 = vmatprep.subr.bf16.mxu0 0
    %1525 = vmatpush1.bf16.msra.mxu0 0
    %1526 = vmatprep.subr.bf16.mxu0 0
    %1527 = vmatpush1.bf16.msra.mxu0 0
    %1528 = vmatprep.subr.bf16.mxu0 0
    %1529 = vmatpush1.bf16.msra.mxu0 0
    %1530 = vmatprep.subr.bf16.mxu0 0
    %1531 = vmatpush1.bf16.msra.mxu0 0
    %1532 = vmatprep.subr.bf16.mxu0 0
    %1533 = vmatpush1.bf16.msra.mxu0 0
    %1534 = vmatprep.subr.bf16.mxu0 0
    %1535 = vmatpush1.bf16.msra.mxu0 %v1176
    %1536 = vmatprep.subr.bf16.mxu0 0
    %1537 = vmatpush1.bf16.msra.mxu0 %v1175
    %1538 = vmatprep.subr.bf16.mxu0 0
    %1539 = vmatpush2.bf16.msra.mxu0 0
    %1540 = vmatprep.subr.bf16.mxu0 0
    %1541 = vmatpush2.bf16.msra.mxu0 0
    %1542 = vmatprep.subr.bf16.mxu0 0
    %1543 = vmatpush2.bf16.msra.mxu0 0
    %1544 = vmatprep.subr.bf16.mxu0 0
    %1545 = vmatpush2.bf16.msra.mxu0 0
    %1546 = vmatprep.subr.bf16.mxu0 0
    %1547 = vmatpush2.bf16.msra.mxu0 0
    %1548 = vmatprep.subr.bf16.mxu0 0
    %1549 = vmatpush2.bf16.msra.mxu0 0
    %1550 = vmatprep.subr.bf16.mxu0 0
    %1551 = vmatpush2.bf16.msra.mxu0 0
    %1552 = vmatprep.subr.bf16.mxu0 0
    %1553 = vmatpush2.bf16.msra.mxu0 0
    %1554 = vmatprep.mubr.bf16.mxu0 0
    %1555 = vmatmul.mubr.bf16.gmra.mxu0 %v1520
    %v1556 = vpop.f32.mrf.mxu0
    %v1557 = vadd.f32 0.0, %v1556
    %v1558 = vpop.f32.mrf.mxu0
    %v1559 = vpop.f32.mrf.mxu0
    %v1560 = vpop.f32.mrf.mxu0
    %1561 = vdwg.mxu0
    %v1562 = vmul.f32 %v1557, 0.5
    %v1563 = vsel %vm404, %v1562, -inf
    %v1564 = vrot.slane %v1563, 4
    %v1565 = vmax.f32 %v1563, %v1564
    %v1566 = vrot.slane %v1565, 2
    %v1567 = vmax.f32 %v1565, %v1566
    %v1568 = vrot.slane %v1567, 1
    %v1569 = vmax.f32 %v1567, %v1568
    %v1570 = vsub.f32 %v1562, %v1569
    %v1571 = vmul.f32 %v1570, 1.442695
    %v1572 = vpow.pop %v1571
    %v1573 = vsel %vm404, %v1572, 0.0
    %v1574 = vrot.slane %v1573, 4
    %v1575 = vadd.f32 %v1573, %v1574
    %v1576 = vrot.slane %v1575, 2
    %v1577 = vadd.f32 %v1575, %v1576
    %v1578 = vrot.slane %v1577, 1
    %v1579 = vadd.f32 %v1577, %v1578
    %v1580 = vrcp.pop %v1579
    %v1581 = vmul.f32 %v1572, %v1580
    %v1582 = vsel %vm404, %v1581, 0.0
    %1583 = vadd.xlane.f32.xlu0 %v1582
    %v1584 = vpop.xlane.xlu0 %1583
    %v1585 = vrcp.pop 8.0
    %v1586 = vmul.f32 %v1584, %v1585
    %1587 = vrot.lane.b32.xlu0 %v990, 32
    %v1588 = vpop.permute.xlu0 %1587
    %vm1590 = vcmask 15360
    %v1591 = vsel %vm1590, %v1588, %v1586
    %vm1592 = vcmask 23552
    %1593 = vst.msk [vmem:[%s23] sm:$0xff] %vm1592, %v1591
    // Predicated region
    $region154: #{tpu_custom_call.1} parent=1 // pred_check
      _
    $region155: #{tpu_custom_call.1} parent=1 // pred_check_branch
      %1595 = sbr.rel (0) target = $region157
    $region156: #{tpu_custom_call.1} parent=1 // pred_region
      _
    $region157: #{tpu_custom_call.1} parent=1 // pred_fallthru
      _
    // Predicated region
    $region158: #{tpu_custom_call.1} parent=1 // pred_check
      _
    $region159: #{tpu_custom_call.1} parent=1 // pred_check_branch
      %1597 = sbr.rel (0) target = $region161
    $region160: #{tpu_custom_call.1} parent=1 // pred_region
      _
    $region161: #{tpu_custom_call.1} parent=1 // pred_fallthru
      _
    %1598 = vsyncpa [#allocation3], 1
    %1599 = vsyncpa [#allocation5], 1
    %1600 = vsyncpa [#allocation8], 1
    %1601 = vsyncpa [#allocation11], 1
    %1602 = vsyncpa [#allocation14], 1
    %1603 = vsyncpa [#allocation17], 1
    %1604 = vsyncpa [#allocation20], 1
    %1605 = vsyncpa [#allocation23], 1

</llo_original>
